<compile_context>
chip_gen: v5e
topology: v5e:2x2
jax: 0.10.0
libtpu: 0.0.40
codegen_flags: <defaults>
</compile_context>

<pallas_src>
import math
import numpy as np
import jax
import jax.numpy as jnp
from jax.experimental import pallas as pl
from jax.experimental.pallas import tpu as pltpu


def _gelu_tanh(x):
    # tanh GELU (gelu_pytorch_tanh); kept in f32 (v5e-safe).
    return 0.5 * x * (1.0 + jnp.tanh(0.7978845608028654 * (x + 0.044715 * x * x * x)))


# ----------------------------------------------------------------- fused Pallas kernel
def fused_coconut_forward(weights, prefix_emb, tail_emb, labels_shift, *, k_tokens):
    """One pallas_call: prefix decode -> K coconut steps -> tail decode -> shifted CE.

    grid=(B,): each program handles one independent batch row ("parallel" so the two
    v7x TensorCores split the batch). Weights are whole-array VMEM blocks revisited by
    every program (no re-DMA); the per-row KV cache is bf16 VMEM scratch updated in
    place with static slice writes.
    """
    B, St, H = tail_emb.shape
    V = weights["Wout"].shape[1]
    has_prefix = prefix_emb is not None
    Sp = int(prefix_emb.shape[1]) if has_prefix else 0
    L = Sp + k_tokens + St                      # total KV-cache length (static)
    # Vocab tile for the online-LSE CE. At real vocab sizes: ~1-2K on v7x (64 MiB VMEM),
    # 2-4K on v5e/v6e, with Wout streamed from HBM.
    V_TILE = min(V, 2048)
    assert V % V_TILE == 0
    n_vt = V // V_TILE

    def kernel(*refs):
        if has_prefix:
            pref_ref, refs = refs[0], refs[1:]
        (tail_ref, lab_ref, wqkv_ref, wpqkv_ref, wproj_ref, wo_ref, w1_ref, w2_ref,
         wout_ref, loss_ref, cnt_ref, kc, vc) = refs

        # Zero the KV scratch once per row: sublane-padded cache reads are masked in
        # the scores but must never touch non-finite stale VMEM.
        kc[...] = jnp.zeros_like(kc)
        vc[...] = jnp.zeros_like(vc)

        # Weights loaded once (bf16, VMEM-resident). No batch broadcast.
        wqkv = wqkv_ref[...]
        wo, w1, w2 = wo_ref[...], w1_ref[...], w2_ref[...]

        def mm(x, w):                           # (S,H) f32 @ (H,N) bf16 -> (S,N) f32
            return jnp.dot(x.astype(jnp.bfloat16), w, preferred_element_type=jnp.float32)

        def decoder_block(x, pos, qkv=None):
            """One decoder layer over x:(S,H); appends K/V at cache rows [pos,pos+S)
            and attends causally over rows [0, pos+S)."""
            S = x.shape[0]
            if qkv is None:
                # Fused QKV: single MXU pass, N=3H; Q columns pre-scaled by 1/sqrt(H).
                qkv = mm(x, wqkv)               # (S, 3H) f32
            kc[pos:pos + S, :] = qkv[:, H:2 * H].astype(jnp.bfloat16)
            vc[pos:pos + S, :] = qkv[:, 2 * H:].astype(jnp.bfloat16)
            klen = pos + S
            klen_pad = min(L, ((klen + 7) // 8) * 8)    # sublane-aligned cache read
            keys = kc[:klen_pad, :]             # bf16, no per-step recast
            vals = vc[:klen_pad, :]
            s = jnp.einsum("qd,kd->qk", qkv[:, :H].astype(jnp.bfloat16), keys,
                           preferred_element_type=jnp.float32)
            qi = jax.lax.broadcasted_iota(jnp.int32, (S, klen_pad), 0) + pos
            kj = jax.lax.broadcasted_iota(jnp.int32, (S, klen_pad), 1)
            s = jnp.where((kj <= qi) & (kj < klen), s, -1e30)   # causal + pad mask (f32)
            m = jnp.max(s, axis=-1, keepdims=True)
            e = jnp.exp(s - m)                  # f32 softmax
            p = e * pl.reciprocal(jnp.sum(e, axis=-1, keepdims=True), approx=True)
            attn = jnp.dot(p.astype(jnp.bfloat16), vals, preferred_element_type=jnp.float32)
            h = x + mm(attn, wo)                # residuals / MLP in f32
            return h + mm(_gelu_tanh(mm(h, w1)), w2)

        # --- prefix decode (Wout never evaluated here) -----------------------------
        if has_prefix:
            h = decoder_block(pref_ref[...], 0)
            last_h = h[Sp - 1:Sp, :]            # (1, H)
        else:
            last_h = jnp.zeros((1, H), jnp.float32)

        # --- K coconut steps: proj(last_h) fed back as the next embedding ----------
        # proj is folded into Wpqkv, so the QKV matmul no longer waits on proj.
        wpqkv, wproj = wpqkv_ref[...], wproj_ref[...]
        for step in range(k_tokens):            # TODO(synk): lax.fori_loop + pl.ds if k_tokens grows large
            lh = last_h.astype(jnp.bfloat16)
            emb = jnp.dot(lh, wproj, preferred_element_type=jnp.float32)     # (1, H)
            qkv = jnp.dot(lh, wpqkv, preferred_element_type=jnp.float32)     # (1, 3H)
            last_h = decoder_block(emb, Sp + step, qkv=qkv)                  # (1, H)

        # --- tail decode + HF shifted CE (ignore_index=-100), online LSE over V ----
        h_tail = decoder_block(tail_ref[...], Sp + k_tokens)                 # (St, H)
        xb = h_tail.astype(jnp.bfloat16)        # cast once for all vocab tiles
        lb = lab_ref[...]                       # (St, 1) pre-shifted labels (last row = -100)
        run_m = jnp.full((St, 1), -1e30, jnp.float32)
        run_s = jnp.zeros((St, 1), jnp.float32)
        tgt = jnp.zeros((St, 1), jnp.float32)
        # TODO(synk): at real vocab sizes stream Wout tiles from HBM instead of VMEM-resident.
        for t in range(n_vt):
            lg = jnp.dot(xb, wout_ref[:, t * V_TILE:(t + 1) * V_TILE],
                         preferred_element_type=jnp.float32)                 # (St, V_TILE)
            m_new = jnp.maximum(run_m, jnp.max(lg, axis=-1, keepdims=True))
            run_s = run_s * jnp.exp(run_m - m_new) + jnp.sum(jnp.exp(lg - m_new),
                                                             axis=-1, keepdims=True)
            run_m = m_new
            col = jax.lax.broadcasted_iota(jnp.int32, (St, V_TILE), 1) + t * V_TILE
            tgt = tgt + jnp.sum(jnp.where(col == lb, lg, 0.0), axis=-1, keepdims=True)
        lse = run_m + jnp.log(run_s)            # (St, 1)
        valid = (lb != -100).astype(jnp.float32)
        loss_ref[...] = jnp.sum((lse - tgt) * valid).reshape(1, 1)   # per-row CE sum
        cnt_ref[...] = jnp.sum(valid).reshape(1, 1)                  # per-row valid count

    inputs = ([prefix_emb] if has_prefix else []) + [
        tail_emb, labels_shift,
        weights["Wqkv"], weights["Wpqkv"], weights["proj"],
        weights["Wo"], weights["W1"], weights["W2"], weights["Wout"]]

    in_specs = ([pl.BlockSpec((None, Sp, H), lambda b: (b, 0, 0))] if has_prefix else []) + [
        pl.BlockSpec((None, St, H), lambda b: (b, 0, 0)),   # tail_emb
        pl.BlockSpec((None, St, 1), lambda b: (b, 0, 0)),   # shifted labels
        pl.BlockSpec((H, 3 * H), lambda b: (0, 0)),         # Wqkv (q pre-scaled)
        pl.BlockSpec((H, 3 * H), lambda b: (0, 0)),         # Wpqkv = proj @ Wqkv
        pl.BlockSpec((H, H), lambda b: (0, 0)),             # proj
        pl.BlockSpec((H, H), lambda b: (0, 0)),             # Wo
        pl.BlockSpec((H, 4 * H), lambda b: (0, 0)),         # W1
        pl.BlockSpec((4 * H, H), lambda b: (0, 0)),         # W2
        pl.BlockSpec((H, V), lambda b: (0, 0)),             # Wout
    ]

    loss_sum, valid_cnt = pl.pallas_call(
        kernel,
        grid=(B,),
        out_shape=(jax.ShapeDtypeStruct((B, 1, 1), jnp.float32),
                   jax.ShapeDtypeStruct((B, 1, 1), jnp.float32)),
        in_specs=in_specs,
        out_specs=(pl.BlockSpec((None, 1, 1), lambda b: (b, 0, 0)),
                   pl.BlockSpec((None, 1, 1), lambda b: (b, 0, 0))),
        scratch_shapes=[pltpu.VMEM((L, H), jnp.bfloat16),   # K cache (per batch row)
                        pltpu.VMEM((L, H), jnp.bfloat16)],  # V cache
        compiler_params=pltpu.CompilerParams(
            dimension_semantics=("parallel",),               # batch rows independent (2 TCs on v7x)
            vmem_limit_bytes=48 * 1024 * 1024),              # headroom vs v7x 64 MiB physical
    )(*inputs)
    # HF CrossEntropyLoss(reduction='mean') over ALL valid tokens in the batch.
    return jnp.sum(loss_sum) / jnp.maximum(jnp.sum(valid_cnt), 1.0)


# ------------------------------------------------------- synthetic base LM parameters
def init_params(key, hidden, vocab):
    ks = jax.random.split(key, 9)
    s = 0.05
    f32 = lambda k, shp: jax.random.normal(k, shp, jnp.float32) * s
    bf16 = lambda k, shp: (jax.random.normal(k, shp, jnp.float32) * s).astype(jnp.bfloat16)
    return dict(
        embed=f32(ks[0], (vocab, hidden)),          # embedding table stays f32
        Wq=bf16(ks[1], (hidden, hidden)),
        Wk=bf16(ks[2], (hidden, hidden)),
        Wv=bf16(ks[3], (hidden, hidden)),
        Wo=bf16(ks[4], (hidden, hidden)),
        W1=bf16(ks[5], (hidden, 4 * hidden)),
        W2=bf16(ks[6], (4 * hidden, hidden)),
        Wout=bf16(ks[7], (hidden, vocab)),
        proj=bf16(ks[8], (hidden, hidden)),  # HiddenStateReuseWrapper.proj (Linear, bias=False)
    )


def prepare_fused_weights(params):
    """One-time XLA weight prep: fuse Q/K/V into (H,3H), fold 1/sqrt(H) into the Q
    columns, and pre-multiply proj @ Wqkv so coconut-step QKV does not wait on proj."""
    H = params["Wq"].shape[0]
    scale = 1.0 / math.sqrt(H)
    wqkv_f32 = jnp.concatenate(
        [params["Wq"].astype(jnp.float32) * scale,
         params["Wk"].astype(jnp.float32),
         params["Wv"].astype(jnp.float32)], axis=1)
    wpqkv_f32 = jnp.dot(params["proj"].astype(jnp.float32), wqkv_f32)
    return dict(
        Wqkv=wqkv_f32.astype(jnp.bfloat16),
        Wpqkv=wpqkv_f32.astype(jnp.bfloat16),
        proj=params["proj"], Wo=params["Wo"], W1=params["W1"], W2=params["W2"],
        Wout=params["Wout"])


# ----------------------------------------------------- HiddenStateReuseWrapper.forward
def hidden_state_reuse_forward(params, input_ids, attention_mask=None, labels=None,
                               *, latent_id, k_tokens):
    if input_ids is None:
        raise ValueError("input_ids required for HiddenStateReuseWrapper")
    B, S = input_ids.shape

    # (input_ids == latent_id).float().argmax(-1).max().item()
    # The reference .item() is a host sync anyway and the value must be a static
    # Python int (it shapes the prefix/tail slices), so compute it host-side once.
    ids_np = np.asarray(jax.device_get(input_ids))
    max_pref = int((ids_np == latent_id).argmax(axis=-1).max())

    # TODO(synk): attention_mask for padded prefixes is not threaded into the synthetic LM.

    tail_start = max_pref + k_tokens
    St = S - tail_start
    if St <= 0 or labels is None:
        raise RuntimeError("No answer tokens supervised — check dataset formatting.")
    tail_ids = input_ids[:, tail_start:]
    labels_tail = labels[:, tail_start:]
    # HF-style label shift on the tiny label tensor (never on logits): tail row t
    # predicts label t+1; the final row is padded with ignore_index=-100.
    labels_shift = jnp.concatenate(
        [labels_tail[:, 1:], jnp.full((B, 1), -100, labels_tail.dtype)], axis=1
    ).astype(jnp.int32).reshape(B, St, 1)

    # Embedding lookup (token-id gather) stays in XLA; everything downstream is one
    # fused Pallas kernel.
    tail_emb = jnp.take(params["embed"], tail_ids, axis=0)
    prefix_emb = (jnp.take(params["embed"], input_ids[:, :max_pref], axis=0)
                  if max_pref > 0 else None)

    weights = prepare_fused_weights(params)
    return fused_coconut_forward(weights, prefix_emb, tail_emb, labels_shift,
                                 k_tokens=k_tokens)


if __name__ == "__main__":
    B, H, V = 2, 128, 256                # lane-dense: H, V multiples of 128
    PREFIX, K_TOKENS, TAIL = 6, 2, 8
    S = PREFIX + K_TOKENS + TAIL         # 16
    LATENT_ID = V - 1                    # 255

    key = jax.random.PRNGKey(0)
    kp, kt = jax.random.split(key)
    params = init_params(kp, H, V)

    input_ids = jax.random.randint(kt, (B, S), 0, V - 1, dtype=jnp.int32)  # never LATENT_ID
    input_ids = input_ids.at[:, PREFIX:PREFIX + K_TOKENS].set(LATENT_ID)
    attention_mask = jnp.ones((B, S), jnp.int32)
    labels = input_ids                   # supervise the tail tokens

    loss = hidden_state_reuse_forward(params, input_ids, attention_mask, labels,
                                      latent_id=LATENT_ID, k_tokens=K_TOKENS)
    loss = jax.block_until_ready(loss)
    assert bool(jnp.isfinite(loss))
    print("KERNEL_OK")
</pallas_src>

<mosaic_0001>
module attributes {stable_mosaic.version = 11 : i64} {
  func.func @kernel(%arg0: i32, %arg1: memref<1x6x128xf32, #tpu.memory_space<vmem>>, %arg2: memref<1x8x128xf32, #tpu.memory_space<vmem>>, %arg3: memref<1x8x1xi32, #tpu.memory_space<vmem>>, %arg4: memref<128x384xbf16, #tpu.memory_space<vmem>>, %arg5: memref<128x384xbf16, #tpu.memory_space<vmem>>, %arg6: memref<128x128xbf16, #tpu.memory_space<vmem>>, %arg7: memref<128x128xbf16, #tpu.memory_space<vmem>>, %arg8: memref<128x512xbf16, #tpu.memory_space<vmem>>, %arg9: memref<512x128xbf16, #tpu.memory_space<vmem>>, %arg10: memref<128x256xbf16, #tpu.memory_space<vmem>>, %arg11: memref<1x1x1xf32, #tpu.memory_space<vmem>>, %arg12: memref<1x1x1xf32, #tpu.memory_space<vmem>>, %arg13: memref<16x128xbf16, #tpu.memory_space<vmem>>, %arg14: memref<16x128xbf16, #tpu.memory_space<vmem>>) attributes {dimension_semantics = [#tpu.dimension_semantics<parallel>], iteration_bounds = array<i64: 2>, scalar_prefetch = 0 : i64, scratch_operands = 2 : i64, tpu.core_type = #tpu.core_type<tc>, window_params = [{transform_indices = @transform_0, window_bounds = array<i64: 1, 6, 128>}, {transform_indices = @transform_1, window_bounds = array<i64: 1, 8, 128>}, {transform_indices = @transform_2, window_bounds = array<i64: 1, 8, 1>}, {pipeline_mode = #tpu.pipeline_mode<synchronous>, transform_indices = @transform_3, window_bounds = array<i64: 128, 384>}, {pipeline_mode = #tpu.pipeline_mode<synchronous>, transform_indices = @transform_4, window_bounds = array<i64: 128, 384>}, {pipeline_mode = #tpu.pipeline_mode<synchronous>, transform_indices = @transform_5, window_bounds = array<i64: 128, 128>}, {pipeline_mode = #tpu.pipeline_mode<synchronous>, transform_indices = @transform_6, window_bounds = array<i64: 128, 128>}, {pipeline_mode = #tpu.pipeline_mode<synchronous>, transform_indices = @transform_7, window_bounds = array<i64: 128, 512>}, {pipeline_mode = #tpu.pipeline_mode<synchronous>, transform_indices = @transform_8, window_bounds = array<i64: 512, 128>}, {pipeline_mode = #tpu.pipeline_mode<synchronous>, transform_indices = @transform_9, window_bounds = array<i64: 128, 256>}, {transform_indices = @transform_10, window_bounds = array<i64: 1, 1, 1>}, {transform_indices = @transform_11, window_bounds = array<i64: 1, 1, 1>}]} {
    %cst = arith.constant 0.000000e+00 : bf16
    %0 = vector.broadcast %cst : bf16 to vector<16x128xbf16>
    %c0 = arith.constant 0 : index
    %c0_0 = arith.constant 0 : index
    %1 = vector.load %arg13[%c0, %c0_0] : memref<16x128xbf16, #tpu.memory_space<vmem>>, vector<16x128xbf16>
    tpu.vector_store %arg13[%c0, %c0_0], %0 {strides = array<i32>} : memref<16x128xbf16, #tpu.memory_space<vmem>>, vector<16x128xbf16>,
    %cst_1 = arith.constant 0.000000e+00 : bf16
    %2 = vector.broadcast %cst_1 : bf16 to vector<16x128xbf16>
    %c0_2 = arith.constant 0 : index
    %c0_3 = arith.constant 0 : index
    %3 = vector.load %arg14[%c0_2, %c0_3] : memref<16x128xbf16, #tpu.memory_space<vmem>>, vector<16x128xbf16>
    tpu.vector_store %arg14[%c0_2, %c0_3], %2 {strides = array<i32>} : memref<16x128xbf16, #tpu.memory_space<vmem>>, vector<16x128xbf16>,
    %c0_4 = arith.constant 0 : index
    %c0_5 = arith.constant 0 : index
    %4 = vector.load %arg4[%c0_4, %c0_5] : memref<128x384xbf16, #tpu.memory_space<vmem>>, vector<128x384xbf16>
    %c0_6 = arith.constant 0 : index
    %c0_7 = arith.constant 0 : index
    %5 = vector.load %arg7[%c0_6, %c0_7] : memref<128x128xbf16, #tpu.memory_space<vmem>>, vector<128x128xbf16>
    %c0_8 = arith.constant 0 : index
    %c0_9 = arith.constant 0 : index
    %6 = vector.load %arg8[%c0_8, %c0_9] : memref<128x512xbf16, #tpu.memory_space<vmem>>, vector<128x512xbf16>
    %c0_10 = arith.constant 0 : index
    %c0_11 = arith.constant 0 : index
    %7 = vector.load %arg9[%c0_10, %c0_11] : memref<512x128xbf16, #tpu.memory_space<vmem>>, vector<512x128xbf16>
    %c0_12 = arith.constant 0 : index
    %c0_13 = arith.constant 0 : index
    %c0_14 = arith.constant 0 : index
    %8 = vector.load %arg1[%c0_12, %c0_13, %c0_14] : memref<1x6x128xf32, #tpu.memory_space<vmem>>, vector<1x6x128xf32>
    %9 = vector.shape_cast %8 : vector<1x6x128xf32> to vector<6x128xf32>
    %10 = arith.truncf %9 : vector<6x128xf32> to vector<6x128xbf16>
    %cst_15 = arith.constant dense<0.000000e+00> : vector<6x384xf32>
    %11 = tpu.matmul %10, %4, %cst_15 {dimension_numbers = #tpu.dot_dimension_numbers<[1], [0], [0], [1], [0, 0, 1, 1], [], []>} : vector<6x128xbf16>, vector<128x384xbf16>, vector<6x384xf32> -> vector<6x384xf32>
    %12 = vector.extract_strided_slice %11 {offsets = [0, 128], sizes = [6, 128], strides = [1, 1]} : vector<6x384xf32> to vector<6x128xf32>
    %13 = arith.truncf %12 : vector<6x128xf32> to vector<6x128xbf16>
    %c0_16 = arith.constant 0 : index
    %c0_17 = arith.constant 0 : index
    %14 = vector.load %arg13[%c0_16, %c0_17] : memref<16x128xbf16, #tpu.memory_space<vmem>>, vector<6x128xbf16>
    tpu.vector_store %arg13[%c0_16, %c0_17], %13 {strides = array<i32>} : memref<16x128xbf16, #tpu.memory_space<vmem>>, vector<6x128xbf16>,
    %15 = vector.extract_strided_slice %11 {offsets = [0, 256], sizes = [6, 128], strides = [1, 1]} : vector<6x384xf32> to vector<6x128xf32>
    %16 = arith.truncf %15 : vector<6x128xf32> to vector<6x128xbf16>
    %c0_18 = arith.constant 0 : index
    %c0_19 = arith.constant 0 : index
    %17 = vector.load %arg14[%c0_18, %c0_19] : memref<16x128xbf16, #tpu.memory_space<vmem>>, vector<6x128xbf16>
    tpu.vector_store %arg14[%c0_18, %c0_19], %16 {strides = array<i32>} : memref<16x128xbf16, #tpu.memory_space<vmem>>, vector<6x128xbf16>,
    %c0_20 = arith.constant 0 : index
    %c0_21 = arith.constant 0 : index
    %18 = vector.load %arg13[%c0_20, %c0_21] : memref<16x128xbf16, #tpu.memory_space<vmem>>, vector<8x128xbf16>
    %c0_22 = arith.constant 0 : index
    %c0_23 = arith.constant 0 : index
    %19 = vector.load %arg14[%c0_22, %c0_23] : memref<16x128xbf16, #tpu.memory_space<vmem>>, vector<8x128xbf16>
    %20 = vector.extract_strided_slice %11 {offsets = [0, 0], sizes = [6, 128], strides = [1, 1]} : vector<6x384xf32> to vector<6x128xf32>
    %21 = arith.truncf %20 : vector<6x128xf32> to vector<6x128xbf16>
    "tpu.trace_start"() <{level = 10 : i32, message = "qd,kd->qk"}> : () -> ()
    %cst_24 = arith.constant dense<0.000000e+00> : vector<6x8xf32>
    %22 = tpu.matmul %21, %18, %cst_24 {dimension_numbers = #tpu.dot_dimension_numbers<[1], [1], [0], [0], [0, 0, 1, 0], [], []>} : vector<6x128xbf16>, vector<8x128xbf16>, vector<6x8xf32> -> vector<6x8xf32>
    "tpu.trace_stop"() : () -> ()
    %23 = tpu.iota {dimensions = array<i32: 0>} : vector<6x8xi32>
    %c0_i32 = arith.constant 0 : i32
    %24 = vector.broadcast %c0_i32 : i32 to vector<6x8xi32>
    %25 = arith.addi %23, %24 : vector<6x8xi32>
    %26 = tpu.iota {dimensions = array<i32: 1>} : vector<6x8xi32>
    %27 = arith.cmpi sle, %26, %25 : vector<6x8xi32>
    %c6_i32 = arith.constant 6 : i32
    %28 = vector.broadcast %c6_i32 : i32 to vector<6x8xi32>
    %29 = arith.cmpi slt, %26, %28 : vector<6x8xi32>
    %30 = arith.andi %27, %29 : vector<6x8xi1>
    %cst_25 = arith.constant -1.000000e+30 : f32
    %31 = vector.broadcast %cst_25 : f32 to vector<6x8xf32>
    %32 = arith.select %30, %22, %31 : vector<6x8xi1>, vector<6x8xf32>
    %cst_26 = arith.constant dense<0xFF800000> : vector<6xf32>
    %33 = vector.multi_reduction <maximumf>, %32, %cst_26 [1] : vector<6x8xf32> to vector<6xf32>
    %34 = vector.shape_cast %33 : vector<6xf32> to vector<6x1xf32>
    %35 = vector.broadcast %34 : vector<6x1xf32> to vector<6x8xf32>
    %36 = arith.subf %32, %35 : vector<6x8xf32>
    %37 = math.exp %36 : vector<6x8xf32>
    %cst_27 = arith.constant dense<0.000000e+00> : vector<6xf32>
    %38 = vector.multi_reduction <add>, %37, %cst_27 [1] : vector<6x8xf32> to vector<6xf32>
    %39 = vector.shape_cast %38 : vector<6xf32> to vector<6x1xf32>
    %40 = tpu.reciprocal %39 {approx = true} : vector<6x1xf32> -> vector<6x1xf32>
    %41 = vector.broadcast %40 : vector<6x1xf32> to vector<6x8xf32>
    %42 = arith.mulf %37, %41 : vector<6x8xf32>
    %43 = arith.truncf %42 : vector<6x8xf32> to vector<6x8xbf16>
    %cst_28 = arith.constant dense<0.000000e+00> : vector<6x128xf32>
    %44 = tpu.matmul %43, %19, %cst_28 {dimension_numbers = #tpu.dot_dimension_numbers<[1], [0], [0], [1], [0, 0, 1, 1], [], []>} : vector<6x8xbf16>, vector<8x128xbf16>, vector<6x128xf32> -> vector<6x128xf32>
    %45 = arith.truncf %44 : vector<6x128xf32> to vector<6x128xbf16>
    %cst_29 = arith.constant dense<0.000000e+00> : vector<6x128xf32>
    %46 = tpu.matmul %45, %5, %cst_29 {dimension_numbers = #tpu.dot_dimension_numbers<[1], [0], [0], [1], [0, 0, 1, 1], [], []>} : vector<6x128xbf16>, vector<128x128xbf16>, vector<6x128xf32> -> vector<6x128xf32>
    %47 = arith.addf %9, %46 : vector<6x128xf32>
    %48 = arith.truncf %47 : vector<6x128xf32> to vector<6x128xbf16>
    %cst_30 = arith.constant dense<0.000000e+00> : vector<6x512xf32>
    %49 = tpu.matmul %48, %6, %cst_30 {dimension_numbers = #tpu.dot_dimension_numbers<[1], [0], [0], [1], [0, 0, 1, 1], [], []>} : vector<6x128xbf16>, vector<128x512xbf16>, vector<6x512xf32> -> vector<6x512xf32>
    %cst_31 = arith.constant 5.000000e-01 : f32
    %50 = vector.broadcast %cst_31 : f32 to vector<6x512xf32>
    %51 = arith.mulf %50, %49 : vector<6x512xf32>
    %cst_32 = arith.constant 4.471500e-02 : f32
    %52 = vector.broadcast %cst_32 : f32 to vector<6x512xf32>
    %53 = arith.mulf %52, %49 : vector<6x512xf32>
    %54 = arith.mulf %53, %49 : vector<6x512xf32>
    %55 = arith.mulf %54, %49 : vector<6x512xf32>
    %56 = arith.addf %49, %55 : vector<6x512xf32>
    %cst_33 = arith.constant 0.797884583 : f32
    %57 = vector.broadcast %cst_33 : f32 to vector<6x512xf32>
    %58 = arith.mulf %57, %56 : vector<6x512xf32>
    %59 = math.tanh %58 : vector<6x512xf32>
    %cst_34 = arith.constant 1.000000e+00 : f32
    %60 = vector.broadcast %cst_34 : f32 to vector<6x512xf32>
    %61 = arith.addf %60, %59 : vector<6x512xf32>
    %62 = arith.mulf %51, %61 : vector<6x512xf32>
    %63 = arith.truncf %62 : vector<6x512xf32> to vector<6x512xbf16>
    %cst_35 = arith.constant dense<0.000000e+00> : vector<6x128xf32>
    %64 = tpu.matmul %63, %7, %cst_35 {dimension_numbers = #tpu.dot_dimension_numbers<[1], [0], [0], [1], [0, 0, 1, 1], [], []>} : vector<6x512xbf16>, vector<512x128xbf16>, vector<6x128xf32> -> vector<6x128xf32>
    %65 = arith.addf %47, %64 : vector<6x128xf32>
    %66 = vector.extract_strided_slice %65 {offsets = [5, 0], sizes = [1, 128], strides = [1, 1]} : vector<6x128xf32> to vector<1x128xf32>
    %c0_36 = arith.constant 0 : index
    %c0_37 = arith.constant 0 : index
    %67 = vector.load %arg5[%c0_36, %c0_37] : memref<128x384xbf16, #tpu.memory_space<vmem>>, vector<128x384xbf16>
    %c0_38 = arith.constant 0 : index
    %c0_39 = arith.constant 0 : index
    %68 = vector.load %arg6[%c0_38, %c0_39] : memref<128x128xbf16, #tpu.memory_space<vmem>>, vector<128x128xbf16>
    %69 = arith.truncf %66 : vector<1x128xf32> to vector<1x128xbf16>
    %cst_40 = arith.constant dense<0.000000e+00> : vector<1x128xf32>
    %70 = tpu.matmul %69, %68, %cst_40 {dimension_numbers = #tpu.dot_dimension_numbers<[1], [0], [0], [1], [0, 0, 1, 1], [], []>} : vector<1x128xbf16>, vector<128x128xbf16>, vector<1x128xf32> -> vector<1x128xf32>
    %cst_41 = arith.constant dense<0.000000e+00> : vector<1x384xf32>
    %71 = tpu.matmul %69, %67, %cst_41 {dimension_numbers = #tpu.dot_dimension_numbers<[1], [0], [0], [1], [0, 0, 1, 1], [], []>} : vector<1x128xbf16>, vector<128x384xbf16>, vector<1x384xf32> -> vector<1x384xf32>
    %72 = vector.extract_strided_slice %71 {offsets = [0, 128], sizes = [1, 128], strides = [1, 1]} : vector<1x384xf32> to vector<1x128xf32>
    %73 = arith.truncf %72 : vector<1x128xf32> to vector<1x128xbf16>
    %c6 = arith.constant 6 : index
    %c0_42 = arith.constant 0 : index
    %74 = vector.load %arg13[%c6, %c0_42] : memref<16x128xbf16, #tpu.memory_space<vmem>>, vector<1x128xbf16>
    tpu.vector_store %arg13[%c6, %c0_42], %73 {strides = array<i32>} : memref<16x128xbf16, #tpu.memory_space<vmem>>, vector<1x128xbf16>,
    %75 = vector.extract_strided_slice %71 {offsets = [0, 256], sizes = [1, 128], strides = [1, 1]} : vector<1x384xf32> to vector<1x128xf32>
    %76 = arith.truncf %75 : vector<1x128xf32> to vector<1x128xbf16>
    %c6_43 = arith.constant 6 : index
    %c0_44 = arith.constant 0 : index
    %77 = vector.load %arg14[%c6_43, %c0_44] : memref<16x128xbf16, #tpu.memory_space<vmem>>, vector<1x128xbf16>
    tpu.vector_store %arg14[%c6_43, %c0_44], %76 {strides = array<i32>} : memref<16x128xbf16, #tpu.memory_space<vmem>>, vector<1x128xbf16>,
    %c0_45 = arith.constant 0 : index
    %c0_46 = arith.constant 0 : index
    %78 = vector.load %arg13[%c0_45, %c0_46] : memref<16x128xbf16, #tpu.memory_space<vmem>>, vector<8x128xbf16>
    %c0_47 = arith.constant 0 : index
    %c0_48 = arith.constant 0 : index
    %79 = vector.load %arg14[%c0_47, %c0_48] : memref<16x128xbf16, #tpu.memory_space<vmem>>, vector<8x128xbf16>
    %80 = vector.extract_strided_slice %71 {offsets = [0, 0], sizes = [1, 128], strides = [1, 1]} : vector<1x384xf32> to vector<1x128xf32>
    %81 = arith.truncf %80 : vector<1x128xf32> to vector<1x128xbf16>
    "tpu.trace_start"() <{level = 10 : i32, message = "qd,kd->qk"}> : () -> ()
    %cst_49 = arith.constant dense<0.000000e+00> : vector<1x8xf32>
    %82 = tpu.matmul %81, %78, %cst_49 {dimension_numbers = #tpu.dot_dimension_numbers<[1], [1], [0], [0], [0, 0, 1, 0], [], []>} : vector<1x128xbf16>, vector<8x128xbf16>, vector<1x8xf32> -> vector<1x8xf32>
    "tpu.trace_stop"() : () -> ()
    %83 = tpu.iota {dimensions = array<i32: 0>} : vector<1x8xi32>
    %c6_i32_50 = arith.constant 6 : i32
    %84 = vector.broadcast %c6_i32_50 : i32 to vector<1x8xi32>
    %85 = arith.addi %83, %84 : vector<1x8xi32>
    %86 = tpu.iota {dimensions = array<i32: 1>} : vector<1x8xi32>
    %87 = arith.cmpi sle, %86, %85 : vector<1x8xi32>
    %c7_i32 = arith.constant 7 : i32
    %88 = vector.broadcast %c7_i32 : i32 to vector<1x8xi32>
    %89 = arith.cmpi slt, %86, %88 : vector<1x8xi32>
    %90 = arith.andi %87, %89 : vector<1x8xi1>
    %cst_51 = arith.constant -1.000000e+30 : f32
    %91 = vector.broadcast %cst_51 : f32 to vector<1x8xf32>
    %92 = arith.select %90, %82, %91 : vector<1x8xi1>, vector<1x8xf32>
    %cst_52 = arith.constant dense<0xFF800000> : vector<1xf32>
    %93 = vector.multi_reduction <maximumf>, %92, %cst_52 [1] : vector<1x8xf32> to vector<1xf32>
    %94 = vector.shape_cast %93 : vector<1xf32> to vector<1x1xf32>
    %95 = vector.broadcast %94 : vector<1x1xf32> to vector<1x8xf32>
    %96 = arith.subf %92, %95 : vector<1x8xf32>
    %97 = math.exp %96 : vector<1x8xf32>
    %cst_53 = arith.constant dense<0.000000e+00> : vector<1xf32>
    %98 = vector.multi_reduction <add>, %97, %cst_53 [1] : vector<1x8xf32> to vector<1xf32>
    %99 = vector.shape_cast %98 : vector<1xf32> to vector<1x1xf32>
    %100 = tpu.reciprocal %99 {approx = true} : vector<1x1xf32> -> vector<1x1xf32>
    %101 = vector.broadcast %100 : vector<1x1xf32> to vector<1x8xf32>
    %102 = arith.mulf %97, %101 : vector<1x8xf32>
    %103 = arith.truncf %102 : vector<1x8xf32> to vector<1x8xbf16>
    %cst_54 = arith.constant dense<0.000000e+00> : vector<1x128xf32>
    %104 = tpu.matmul %103, %79, %cst_54 {dimension_numbers = #tpu.dot_dimension_numbers<[1], [0], [0], [1], [0, 0, 1, 1], [], []>} : vector<1x8xbf16>, vector<8x128xbf16>, vector<1x128xf32> -> vector<1x128xf32>
    %105 = arith.truncf %104 : vector<1x128xf32> to vector<1x128xbf16>
    %cst_55 = arith.constant dense<0.000000e+00> : vector<1x128xf32>
    %106 = tpu.matmul %105, %5, %cst_55 {dimension_numbers = #tpu.dot_dimension_numbers<[1], [0], [0], [1], [0, 0, 1, 1], [], []>} : vector<1x128xbf16>, vector<128x128xbf16>, vector<1x128xf32> -> vector<1x128xf32>
    %107 = arith.addf %70, %106 : vector<1x128xf32>
    %108 = arith.truncf %107 : vector<1x128xf32> to vector<1x128xbf16>
    %cst_56 = arith.constant dense<0.000000e+00> : vector<1x512xf32>
    %109 = tpu.matmul %108, %6, %cst_56 {dimension_numbers = #tpu.dot_dimension_numbers<[1], [0], [0], [1], [0, 0, 1, 1], [], []>} : vector<1x128xbf16>, vector<128x512xbf16>, vector<1x512xf32> -> vector<1x512xf32>
    %cst_57 = arith.constant 5.000000e-01 : f32
    %110 = vector.broadcast %cst_57 : f32 to vector<1x512xf32>
    %111 = arith.mulf %110, %109 : vector<1x512xf32>
    %cst_58 = arith.constant 4.471500e-02 : f32
    %112 = vector.broadcast %cst_58 : f32 to vector<1x512xf32>
    %113 = arith.mulf %112, %109 : vector<1x512xf32>
    %114 = arith.mulf %113, %109 : vector<1x512xf32>
    %115 = arith.mulf %114, %109 : vector<1x512xf32>
    %116 = arith.addf %109, %115 : vector<1x512xf32>
    %cst_59 = arith.constant 0.797884583 : f32
    %117 = vector.broadcast %cst_59 : f32 to vector<1x512xf32>
    %118 = arith.mulf %117, %116 : vector<1x512xf32>
    %119 = math.tanh %118 : vector<1x512xf32>
    %cst_60 = arith.constant 1.000000e+00 : f32
    %120 = vector.broadcast %cst_60 : f32 to vector<1x512xf32>
    %121 = arith.addf %120, %119 : vector<1x512xf32>
    %122 = arith.mulf %111, %121 : vector<1x512xf32>
    %123 = arith.truncf %122 : vector<1x512xf32> to vector<1x512xbf16>
    %cst_61 = arith.constant dense<0.000000e+00> : vector<1x128xf32>
    %124 = tpu.matmul %123, %7, %cst_61 {dimension_numbers = #tpu.dot_dimension_numbers<[1], [0], [0], [1], [0, 0, 1, 1], [], []>} : vector<1x512xbf16>, vector<512x128xbf16>, vector<1x128xf32> -> vector<1x128xf32>
    %125 = arith.addf %107, %124 : vector<1x128xf32>
    %126 = arith.truncf %125 : vector<1x128xf32> to vector<1x128xbf16>
    %cst_62 = arith.constant dense<0.000000e+00> : vector<1x384xf32>
    %127 = tpu.matmul %126, %67, %cst_62 {dimension_numbers = #tpu.dot_dimension_numbers<[1], [0], [0], [1], [0, 0, 1, 1], [], []>} : vector<1x128xbf16>, vector<128x384xbf16>, vector<1x384xf32> -> vector<1x384xf32>
    %128 = vector.extract_strided_slice %127 {offsets = [0, 128], sizes = [1, 128], strides = [1, 1]} : vector<1x384xf32> to vector<1x128xf32>
    %129 = arith.truncf %128 : vector<1x128xf32> to vector<1x128xbf16>
    %c7 = arith.constant 7 : index
    %c0_63 = arith.constant 0 : index
    %130 = vector.load %arg13[%c7, %c0_63] : memref<16x128xbf16, #tpu.memory_space<vmem>>, vector<1x128xbf16>
    tpu.vector_store %arg13[%c7, %c0_63], %129 {strides = array<i32>} : memref<16x128xbf16, #tpu.memory_space<vmem>>, vector<1x128xbf16>,
    %131 = vector.extract_strided_slice %127 {offsets = [0, 256], sizes = [1, 128], strides = [1, 1]} : vector<1x384xf32> to vector<1x128xf32>
    %132 = arith.truncf %131 : vector<1x128xf32> to vector<1x128xbf16>
    %c7_64 = arith.constant 7 : index
    %c0_65 = arith.constant 0 : index
    %133 = vector.load %arg14[%c7_64, %c0_65] : memref<16x128xbf16, #tpu.memory_space<vmem>>, vector<1x128xbf16>
    tpu.vector_store %arg14[%c7_64, %c0_65], %132 {strides = array<i32>} : memref<16x128xbf16, #tpu.memory_space<vmem>>, vector<1x128xbf16>,
    %c0_66 = arith.constant 0 : index
    %c0_67 = arith.constant 0 : index
    %c0_68 = arith.constant 0 : index
    %134 = vector.load %arg2[%c0_66, %c0_67, %c0_68] : memref<1x8x128xf32, #tpu.memory_space<vmem>>, vector<1x8x128xf32>
    %135 = vector.shape_cast %134 : vector<1x8x128xf32> to vector<8x128xf32>
    %136 = arith.truncf %135 : vector<8x128xf32> to vector<8x128xbf16>
    %cst_69 = arith.constant dense<0.000000e+00> : vector<8x384xf32>
    %137 = tpu.matmul %136, %4, %cst_69 {dimension_numbers = #tpu.dot_dimension_numbers<[1], [0], [0], [1], [0, 0, 1, 1], [], []>} : vector<8x128xbf16>, vector<128x384xbf16>, vector<8x384xf32> -> vector<8x384xf32>
    %138 = vector.extract_strided_slice %137 {offsets = [0, 128], sizes = [8, 128], strides = [1, 1]} : vector<8x384xf32> to vector<8x128xf32>
    %139 = arith.truncf %138 : vector<8x128xf32> to vector<8x128xbf16>
    %c8 = arith.constant 8 : index
    %c0_70 = arith.constant 0 : index
    %140 = vector.load %arg13[%c8, %c0_70] : memref<16x128xbf16, #tpu.memory_space<vmem>>, vector<8x128xbf16>
    tpu.vector_store %arg13[%c8, %c0_70], %139 {strides = array<i32>} : memref<16x128xbf16, #tpu.memory_space<vmem>>, vector<8x128xbf16>,
    %141 = vector.extract_strided_slice %137 {offsets = [0, 256], sizes = [8, 128], strides = [1, 1]} : vector<8x384xf32> to vector<8x128xf32>
    %142 = arith.truncf %141 : vector<8x128xf32> to vector<8x128xbf16>
    %c8_71 = arith.constant 8 : index
    %c0_72 = arith.constant 0 : index
    %143 = vector.load %arg14[%c8_71, %c0_72] : memref<16x128xbf16, #tpu.memory_space<vmem>>, vector<8x128xbf16>
    tpu.vector_store %arg14[%c8_71, %c0_72], %142 {strides = array<i32>} : memref<16x128xbf16, #tpu.memory_space<vmem>>, vector<8x128xbf16>,
    %c0_73 = arith.constant 0 : index
    %c0_74 = arith.constant 0 : index
    %144 = vector.load %arg13[%c0_73, %c0_74] : memref<16x128xbf16, #tpu.memory_space<vmem>>, vector<16x128xbf16>
    %c0_75 = arith.constant 0 : index
    %c0_76 = arith.constant 0 : index
    %145 = vector.load %arg14[%c0_75, %c0_76] : memref<16x128xbf16, #tpu.memory_space<vmem>>, vector<16x128xbf16>
    %146 = vector.extract_strided_slice %137 {offsets = [0, 0], sizes = [8, 128], strides = [1, 1]} : vector<8x384xf32> to vector<8x128xf32>
    %147 = arith.truncf %146 : vector<8x128xf32> to vector<8x128xbf16>
    "tpu.trace_start"() <{level = 10 : i32, message = "qd,kd->qk"}> : () -> ()
    %cst_77 = arith.constant dense<0.000000e+00> : vector<8x16xf32>
    %148 = tpu.matmul %147, %144, %cst_77 {dimension_numbers = #tpu.dot_dimension_numbers<[1], [1], [0], [0], [0, 0, 1, 0], [], []>} : vector<8x128xbf16>, vector<16x128xbf16>, vector<8x16xf32> -> vector<8x16xf32>
    "tpu.trace_stop"() : () -> ()
    %149 = tpu.iota {dimensions = array<i32: 0>} : vector<8x16xi32>
    %c8_i32 = arith.constant 8 : i32
    %150 = vector.broadcast %c8_i32 : i32 to vector<8x16xi32>
    %151 = arith.addi %149, %150 : vector<8x16xi32>
    %152 = tpu.iota {dimensions = array<i32: 1>} : vector<8x16xi32>
    %153 = arith.cmpi sle, %152, %151 : vector<8x16xi32>
    %c16_i32 = arith.constant 16 : i32
    %154 = vector.broadcast %c16_i32 : i32 to vector<8x16xi32>
    %155 = arith.cmpi slt, %152, %154 : vector<8x16xi32>
    %156 = arith.andi %153, %155 : vector<8x16xi1>
    %cst_78 = arith.constant -1.000000e+30 : f32
    %157 = vector.broadcast %cst_78 : f32 to vector<8x16xf32>
    %158 = arith.select %156, %148, %157 : vector<8x16xi1>, vector<8x16xf32>
    %cst_79 = arith.constant dense<0xFF800000> : vector<8xf32>
    %159 = vector.multi_reduction <maximumf>, %158, %cst_79 [1] : vector<8x16xf32> to vector<8xf32>
    %160 = vector.shape_cast %159 : vector<8xf32> to vector<8x1xf32>
    %161 = vector.broadcast %160 : vector<8x1xf32> to vector<8x16xf32>
    %162 = arith.subf %158, %161 : vector<8x16xf32>
    %163 = math.exp %162 : vector<8x16xf32>
    %cst_80 = arith.constant dense<0.000000e+00> : vector<8xf32>
    %164 = vector.multi_reduction <add>, %163, %cst_80 [1] : vector<8x16xf32> to vector<8xf32>
    %165 = vector.shape_cast %164 : vector<8xf32> to vector<8x1xf32>
    %166 = tpu.reciprocal %165 {approx = true} : vector<8x1xf32> -> vector<8x1xf32>
    %167 = vector.broadcast %166 : vector<8x1xf32> to vector<8x16xf32>
    %168 = arith.mulf %163, %167 : vector<8x16xf32>
    %169 = arith.truncf %168 : vector<8x16xf32> to vector<8x16xbf16>
    %cst_81 = arith.constant dense<0.000000e+00> : vector<8x128xf32>
    %170 = tpu.matmul %169, %145, %cst_81 {dimension_numbers = #tpu.dot_dimension_numbers<[1], [0], [0], [1], [0, 0, 1, 1], [], []>} : vector<8x16xbf16>, vector<16x128xbf16>, vector<8x128xf32> -> vector<8x128xf32>
    %171 = arith.truncf %170 : vector<8x128xf32> to vector<8x128xbf16>
    %cst_82 = arith.constant dense<0.000000e+00> : vector<8x128xf32>
    %172 = tpu.matmul %171, %5, %cst_82 {dimension_numbers = #tpu.dot_dimension_numbers<[1], [0], [0], [1], [0, 0, 1, 1], [], []>} : vector<8x128xbf16>, vector<128x128xbf16>, vector<8x128xf32> -> vector<8x128xf32>
    %173 = arith.addf %135, %172 : vector<8x128xf32>
    %174 = arith.truncf %173 : vector<8x128xf32> to vector<8x128xbf16>
    %cst_83 = arith.constant dense<0.000000e+00> : vector<8x512xf32>
    %175 = tpu.matmul %174, %6, %cst_83 {dimension_numbers = #tpu.dot_dimension_numbers<[1], [0], [0], [1], [0, 0, 1, 1], [], []>} : vector<8x128xbf16>, vector<128x512xbf16>, vector<8x512xf32> -> vector<8x512xf32>
    %cst_84 = arith.constant 5.000000e-01 : f32
    %176 = vector.broadcast %cst_84 : f32 to vector<8x512xf32>
    %177 = arith.mulf %176, %175 : vector<8x512xf32>
    %cst_85 = arith.constant 4.471500e-02 : f32
    %178 = vector.broadcast %cst_85 : f32 to vector<8x512xf32>
    %179 = arith.mulf %178, %175 : vector<8x512xf32>
    %180 = arith.mulf %179, %175 : vector<8x512xf32>
    %181 = arith.mulf %180, %175 : vector<8x512xf32>
    %182 = arith.addf %175, %181 : vector<8x512xf32>
    %cst_86 = arith.constant 0.797884583 : f32
    %183 = vector.broadcast %cst_86 : f32 to vector<8x512xf32>
    %184 = arith.mulf %183, %182 : vector<8x512xf32>
    %185 = math.tanh %184 : vector<8x512xf32>
    %cst_87 = arith.constant 1.000000e+00 : f32
    %186 = vector.broadcast %cst_87 : f32 to vector<8x512xf32>
    %187 = arith.addf %186, %185 : vector<8x512xf32>
    %188 = arith.mulf %177, %187 : vector<8x512xf32>
    %189 = arith.truncf %188 : vector<8x512xf32> to vector<8x512xbf16>
    %cst_88 = arith.constant dense<0.000000e+00> : vector<8x128xf32>
    %190 = tpu.matmul %189, %7, %cst_88 {dimension_numbers = #tpu.dot_dimension_numbers<[1], [0], [0], [1], [0, 0, 1, 1], [], []>} : vector<8x512xbf16>, vector<512x128xbf16>, vector<8x128xf32> -> vector<8x128xf32>
    %191 = arith.addf %173, %190 : vector<8x128xf32>
    %192 = arith.truncf %191 : vector<8x128xf32> to vector<8x128xbf16>
    %c0_89 = arith.constant 0 : index
    %c0_90 = arith.constant 0 : index
    %c0_91 = arith.constant 0 : index
    %193 = vector.load %arg3[%c0_89, %c0_90, %c0_91] : memref<1x8x1xi32, #tpu.memory_space<vmem>>, vector<1x8x1xi32>
    %194 = vector.shape_cast %193 : vector<1x8x1xi32> to vector<8x1xi32>
    %cst_92 = arith.constant -1.000000e+30 : f32
    %195 = vector.broadcast %cst_92 : f32 to vector<8x1xf32>
    %cst_93 = arith.constant 0.000000e+00 : f32
    %196 = vector.broadcast %cst_93 : f32 to vector<8x1xf32>
    %cst_94 = arith.constant 0.000000e+00 : f32
    %197 = vector.broadcast %cst_94 : f32 to vector<8x1xf32>
    %c0_95 = arith.constant 0 : index
    %c0_96 = arith.constant 0 : index
    %198 = vector.load %arg10[%c0_95, %c0_96] : memref<128x256xbf16, #tpu.memory_space<vmem>>, vector<128x256xbf16>
    %cst_97 = arith.constant dense<0.000000e+00> : vector<8x256xf32>
    %199 = tpu.matmul %192, %198, %cst_97 {dimension_numbers = #tpu.dot_dimension_numbers<[1], [0], [0], [1], [0, 0, 1, 1], [], []>} : vector<8x128xbf16>, vector<128x256xbf16>, vector<8x256xf32> -> vector<8x256xf32>
    %cst_98 = arith.constant dense<0xFF800000> : vector<8xf32>
    %200 = vector.multi_reduction <maximumf>, %199, %cst_98 [1] : vector<8x256xf32> to vector<8xf32>
    %201 = vector.shape_cast %200 : vector<8xf32> to vector<8x1xf32>
    %202 = arith.maximumf %195, %201 : vector<8x1xf32>
    %203 = arith.subf %195, %202 : vector<8x1xf32>
    %204 = math.exp %203 : vector<8x1xf32>
    %205 = arith.mulf %196, %204 : vector<8x1xf32>
    %206 = vector.broadcast %202 : vector<8x1xf32> to vector<8x256xf32>
    %207 = arith.subf %199, %206 : vector<8x256xf32>
    %208 = math.exp %207 : vector<8x256xf32>
    %cst_99 = arith.constant dense<0.000000e+00> : vector<8xf32>
    %209 = vector.multi_reduction <add>, %208, %cst_99 [1] : vector<8x256xf32> to vector<8xf32>
    %210 = vector.shape_cast %209 : vector<8xf32> to vector<8x1xf32>
    %211 = arith.addf %205, %210 : vector<8x1xf32>
    %212 = tpu.iota {dimensions = array<i32: 1>} : vector<8x256xi32>
    %c0_i32_100 = arith.constant 0 : i32
    %213 = vector.broadcast %c0_i32_100 : i32 to vector<8x256xi32>
    %214 = arith.addi %212, %213 : vector<8x256xi32>
    %215 = vector.broadcast %194 : vector<8x1xi32> to vector<8x256xi32>
    %216 = arith.cmpi eq, %214, %215 : vector<8x256xi32>
    %cst_101 = arith.constant 0.000000e+00 : f32
    %217 = vector.broadcast %cst_101 : f32 to vector<8x256xf32>
    %218 = arith.select %216, %199, %217 : vector<8x256xi1>, vector<8x256xf32>
    %cst_102 = arith.constant dense<0.000000e+00> : vector<8xf32>
    %219 = vector.multi_reduction <add>, %218, %cst_102 [1] : vector<8x256xf32> to vector<8xf32>
    %220 = vector.shape_cast %219 : vector<8xf32> to vector<8x1xf32>
    %221 = arith.addf %197, %220 : vector<8x1xf32>
    %222 = math.log %211 : vector<8x1xf32>
    %223 = arith.addf %202, %222 : vector<8x1xf32>
    %c-100_i32 = arith.constant -100 : i32
    %224 = vector.broadcast %c-100_i32 : i32 to vector<8x1xi32>
    %225 = arith.cmpi ne, %194, %224 : vector<8x1xi32>
    %226 = arith.extui %225 : vector<8x1xi1> to vector<8x1xi32>
    %227 = arith.sitofp %226 : vector<8x1xi32> to vector<8x1xf32>
    %228 = arith.subf %223, %221 : vector<8x1xf32>
    %229 = arith.mulf %228, %227 : vector<8x1xf32>
    %230 = vector.shape_cast %229 : vector<8x1xf32> to vector<1x8x1xf32>
    %cst_103 = arith.constant dense<0.000000e+00> : vector<1xf32>
    %231 = vector.multi_reduction <add>, %230, %cst_103 [1, 2] : vector<1x8x1xf32> to vector<1xf32>
    %232 = vector.shape_cast %231 : vector<1xf32> to vector<1x1x1xf32>
    %233 = vector.extract %232[0, 0, 0] : f32 from vector<1x1x1xf32>
    %234 = vector.broadcast %233 : f32 to vector<1x1xf32>
    %c0_104 = arith.constant 0 : index
    %c0_105 = arith.constant 0 : index
    %c0_106 = arith.constant 0 : index
    %235 = vector.load %arg11[%c0_104, %c0_105, %c0_106] : memref<1x1x1xf32, #tpu.memory_space<vmem>>, vector<1x1x1xf32>
    %236 = vector.shape_cast %235 : vector<1x1x1xf32> to vector<1x1xf32>
    %237 = vector.shape_cast %234 : vector<1x1xf32> to vector<1x1x1xf32>
    tpu.vector_store %arg11[%c0_104, %c0_105, %c0_106], %237 {strides = array<i32>} : memref<1x1x1xf32, #tpu.memory_space<vmem>>, vector<1x1x1xf32>,
    %238 = vector.shape_cast %227 : vector<8x1xf32> to vector<1x8x1xf32>
    %cst_107 = arith.constant dense<0.000000e+00> : vector<1xf32>
    %239 = vector.multi_reduction <add>, %238, %cst_107 [1, 2] : vector<1x8x1xf32> to vector<1xf32>
    %240 = vector.shape_cast %239 : vector<1xf32> to vector<1x1x1xf32>
    %241 = vector.extract %240[0, 0, 0] : f32 from vector<1x1x1xf32>
    %242 = vector.broadcast %241 : f32 to vector<1x1xf32>
    %c0_108 = arith.constant 0 : index
    %c0_109 = arith.constant 0 : index
    %c0_110 = arith.constant 0 : index
    %243 = vector.load %arg12[%c0_108, %c0_109, %c0_110] : memref<1x1x1xf32, #tpu.memory_space<vmem>>, vector<1x1x1xf32>
    %244 = vector.shape_cast %243 : vector<1x1x1xf32> to vector<1x1xf32>
    %245 = vector.shape_cast %242 : vector<1x1xf32> to vector<1x1x1xf32>
    tpu.vector_store %arg12[%c0_108, %c0_109, %c0_110], %245 {strides = array<i32>} : memref<1x1x1xf32, #tpu.memory_space<vmem>>, vector<1x1x1xf32>,
    return
  }
  func.func @transform_0(%arg0: i32) -> (i32, i32, i32) {
    %c0_i32 = arith.constant 0 : i32
    %c0_i32_0 = arith.constant 0 : i32
    %c0_i32_1 = arith.constant 0 : i32
    return %arg0, %c0_i32, %c0_i32_0 : i32, i32, i32
  }
  func.func @transform_1(%arg0: i32) -> (i32, i32, i32) {
    %c0_i32 = arith.constant 0 : i32
    %c0_i32_0 = arith.constant 0 : i32
    %c0_i32_1 = arith.constant 0 : i32
    return %arg0, %c0_i32, %c0_i32_0 : i32, i32, i32
  }
  func.func @transform_2(%arg0: i32) -> (i32, i32, i32) {
    %c0_i32 = arith.constant 0 : i32
    %c0_i32_0 = arith.constant 0 : i32
    %c0_i32_1 = arith.constant 0 : i32
    return %arg0, %c0_i32, %c0_i32_0 : i32, i32, i32
  }
  func.func @transform_3(%arg0: i32) -> (i32, i32) {
    %c0_i32 = arith.constant 0 : i32
    %c0_i32_0 = arith.constant 0 : i32
    %c0_i32_1 = arith.constant 0 : i32
    return %c0_i32, %c0_i32_0 : i32, i32
  }
  func.func @transform_4(%arg0: i32) -> (i32, i32) {
    %c0_i32 = arith.constant 0 : i32
    %c0_i32_0 = arith.constant 0 : i32
    %c0_i32_1 = arith.constant 0 : i32
    return %c0_i32, %c0_i32_0 : i32, i32
  }
  func.func @transform_5(%arg0: i32) -> (i32, i32) {
    %c0_i32 = arith.constant 0 : i32
    %c0_i32_0 = arith.constant 0 : i32
    %c0_i32_1 = arith.constant 0 : i32
    return %c0_i32, %c0_i32_0 : i32, i32
  }
  func.func @transform_6(%arg0: i32) -> (i32, i32) {
    %c0_i32 = arith.constant 0 : i32
    %c0_i32_0 = arith.constant 0 : i32
    %c0_i32_1 = arith.constant 0 : i32
    return %c0_i32, %c0_i32_0 : i32, i32
  }
  func.func @transform_7(%arg0: i32) -> (i32, i32) {
    %c0_i32 = arith.constant 0 : i32
    %c0_i32_0 = arith.constant 0 : i32
    %c0_i32_1 = arith.constant 0 : i32
    return %c0_i32, %c0_i32_0 : i32, i32
  }
  func.func @transform_8(%arg0: i32) -> (i32, i32) {
    %c0_i32 = arith.constant 0 : i32
    %c0_i32_0 = arith.constant 0 : i32
    %c0_i32_1 = arith.constant 0 : i32
    return %c0_i32, %c0_i32_0 : i32, i32
  }
  func.func @transform_9(%arg0: i32) -> (i32, i32) {
    %c0_i32 = arith.constant 0 : i32
    %c0_i32_0 = arith.constant 0 : i32
    %c0_i32_1 = arith.constant 0 : i32
    return %c0_i32, %c0_i32_0 : i32, i32
  }
  func.func @transform_10(%arg0: i32) -> (i32, i32, i32) {
    %c0_i32 = arith.constant 0 : i32
    %c0_i32_0 = arith.constant 0 : i32
    %c0_i32_1 = arith.constant 0 : i32
    return %arg0, %c0_i32, %c0_i32_0 : i32, i32, i32
  }
  func.func @transform_11(%arg0: i32) -> (i32, i32, i32) {
    %c0_i32 = arith.constant 0 : i32
    %c0_i32_0 = arith.constant 0 : i32
    %c0_i32_1 = arith.constant 0 : i32
    return %arg0, %c0_i32, %c0_i32_0 : i32, i32, i32
  }
}

</mosaic_0001>

<llo_original>
// kernel: tpu_custom_call.1
$region0: #{tpu_custom_call.1}
  #allocation0 [shape = 'u32[]', space=smem, size = 0x4, offset = 0x4, fixed_abs, tag = 'smem constant byte address 0x4 - core index']
  #allocation1 [shape = 'u32[72,128]{1,0:T(1,128)}', space=vmem, size = 0x9000, scoped, tag = 'internal scratch']
  #allocation2 [shape = 'bf16[16,128]{1,0:T(8,128)(2,1)}', space=vmem, size = 0x1000, scoped, tag = 'scratch operand']
  #allocation3 [shape = 'bf16[16,128]{1,0:T(8,128)(2,1)}', space=vmem, size = 0x1000, scoped, tag = 'scratch operand']
  %s0 = inlined_call_operand.vmem [shape: f32[2,6,128], index: 0, kind: input, shape index: {}]
  %s1 = inlined_call_operand.vmem [shape: f32[2,8,128], index: 1, kind: input, shape index: {}]
  %s2 = inlined_call_operand.vmem [shape: s32[2,8,1], index: 2, kind: input, shape index: {}]
  %s3 = inlined_call_operand.hbm [shape: bf16[128,384], index: 3, kind: input, shape index: {}]
  %s4 = inlined_call_operand.hbm [shape: bf16[128,384], index: 4, kind: input, shape index: {}]
  %s5 = inlined_call_operand.hbm [shape: bf16[128,128], index: 5, kind: input, shape index: {}]
  %s6 = inlined_call_operand.hbm [shape: bf16[128,128], index: 6, kind: input, shape index: {}]
  %s7 = inlined_call_operand.hbm [shape: bf16[128,512], index: 7, kind: input, shape index: {}]
  %s8 = inlined_call_operand.hbm [shape: bf16[512,128], index: 8, kind: input, shape index: {}]
  %s9 = inlined_call_operand.hbm [shape: bf16[128,256], index: 9, kind: input, shape index: {}]
  %s10 = inlined_call_operand.vmem [shape: f32[2,1,1], index: 10, kind: output, shape index: {0}]
  %s11 = inlined_call_operand.vmem [shape: f32[2,1,1], index: 11, kind: output, shape index: {1}]
  %12 = xla_tuple %s10, %s11
  %s13 = sld [smem:[#allocation0]]
  $region109: #{tpu_custom_call.1} parent=0
    _
  %s15 = ssub.s32 1, %s13
  %s16 = scalar_select 0, %s15, %s13
  $region1: #{tpu_custom_call.1} parent=0
    #allocation4 [shape = 'u8[98304]{0}', space=vmem, size = 0x18000, scoped, tag = 'input window, operand 3, single buffered']
    #allocation5 [shape = 's32[2]{0}', space=sflag, size = 0x8, scoped, tag = 'scoped memory for tpu_custom_call.1']
    #allocation6 [shape = 'u8[98304]{0}', space=vmem, size = 0x18000, scoped, tag = 'input window, operand 4, single buffered']
    #allocation7 [shape = 's32[1]{0}', space=sflag, size = 0x4, scoped, tag = 'scoped memory for tpu_custom_call.1']
    #allocation8 [shape = 'u8[32768]{0}', space=vmem, size = 0x8000, scoped, tag = 'input window, operand 5, single buffered']
    #allocation9 [shape = 'u8[32768]{0}', space=vmem, size = 0x8000, scoped, tag = 'input window, operand 6, single buffered']
    #allocation10 [shape = 's32[1]{0}', space=sflag, size = 0x4, scoped, tag = 'scoped memory for tpu_custom_call.1']
    #allocation11 [shape = 'u8[131072]{0}', space=vmem, size = 0x20000, scoped, tag = 'input window, operand 7, single buffered']
    #allocation12 [shape = 'u8[131072]{0}', space=vmem, size = 0x20000, scoped, tag = 'input window, operand 8, single buffered']
    #allocation13 [shape = 's32[1]{0}', space=sflag, size = 0x4, scoped, tag = 'scoped memory for tpu_custom_call.1']
    #allocation14 [shape = 'u8[65536]{0}', space=vmem, size = 0x10000, scoped, tag = 'input window, operand 9, single buffered']
    %17 = vsyncpa [#allocation5], 0
    %18 = vsyncpa [#allocation7], 0
    %19 = vsyncpa [#allocation10], 0
    %20 = vsyncpa [#allocation13], 0
    loop: start=0, step=1, limit=4
    $region2: #{tpu_custom_call.1} parent=1 // loop_pre_header
      _
    $region3: #{tpu_custom_call.1} parent=1 // loop_header
      %s22 = sphi 0, %s26
      %p23 = scmp.ge.s32.totalorder %s22, 4
      %s32 = sphi 0, %s34
      %s35 = sphi 0, %s32
      %s36 = sphi 0, %s35
      %s52 = sphi 0, %s36
      %s58 = sphi 0, %s60
      %s61 = sphi 0, %s58
      %s62 = sphi 0, %s61
      %s78 = sphi 0, %s62
      %s84 = sphi 0, %s86
      %s87 = sphi 0, %s84
      %s88 = sphi 0, %s87
      %s104 = sphi 0, %s88
      %s108 = sphi 0, %s108
      %s110 = sphi 0, %s108
      %s111 = sphi 0, %s110
      %s125 = sphi 0, %s111
      %s129 = sphi 0, %s129
      %s131 = sphi 0, %s129
      %s132 = sphi 0, %s131
      %s146 = sphi 0, %s132
      %s150 = sphi 0, %s150
      %s152 = sphi 0, %s150
      %s153 = sphi 0, %s152
      %s167 = sphi 0, %s153
      %s171 = sphi 0, %s171
      %s173 = sphi 0, %s171
      %s174 = sphi 0, %s173
      %s188 = sphi 0, %s174
      %s192 = sphi 0, %s192
      %s194 = sphi 0, %s192
      %s195 = sphi 0, %s194
      %s209 = sphi 0, %s195
      %s213 = sphi 0, %s213
      %s215 = sphi 0, %s213
      %s216 = sphi 0, %s215
      %s230 = sphi 0, %s216
      %s234 = sphi 0, %s234
      %s236 = sphi 0, %s234
      %s237 = sphi 0, %s236
      %s251 = sphi 0, %s237
      %s257 = sphi 0, %s259
      %s260 = sphi 0, %s257
      %s261 = sphi 0, %s260
      %s277 = sphi 0, %s261
      %s283 = sphi 0, %s285
      %s286 = sphi 0, %s283
      %s287 = sphi 0, %s286
      %s303 = sphi 0, %s287
    $region4: #{tpu_custom_call.1} parent=1 // loop_header_branch
      %25 = sbr.rel (%p23) target = $region8
    $region5: #{tpu_custom_call.1} parent=1 // loop_body
      %s27 = ssub.s32 %s22, 1
      %s28 = ssub.s32 %s22, 2
      %s29 = sadd.s32 %s22, 1
      %s30 = ssub.s32 %s22, %s29
      %p31 = scmp.eq.s32.totalorder %s30, 0
      %s33 = sadd.s32 %s32, 1
      %s34 = scalar_select %p31, %s32, %s33
      %p37 = pneg %p31
      %p38 = scmp.eq.s32.totalorder %s22, 1
      %p39 = por %p37, %p38
      %p40 = scmp.ne.s32.totalorder %s32, %s35
      %p41 = scmp.eq.s32.totalorder %s22, 0
      %p42 = por %p40, %p41
      %p43 = scmp.ne.s32.totalorder %s32, %s35
      %p44 = scmp.eq.s32.totalorder %s27, 1
      %p45 = por %p43, %p44
      %p46 = scmp.ne.s32.totalorder %s35, %s36
      %p47 = scmp.eq.s32.totalorder %s27, 0
      %p48 = por %p46, %p47
      %p49 = scmp.ne.s32.totalorder %s35, %s36
      %p50 = scmp.eq.s32.totalorder %s28, 1
      %p51 = por %p49, %p50
      %p53 = scmp.ne.s32.totalorder %s36, %s52
      %p54 = scmp.eq.s32.totalorder %s28, 0
      %p55 = por %p53, %p54
      %s56 = ssub.s32 %s22, %s29
      %p57 = scmp.eq.s32.totalorder %s56, 0
      %s59 = sadd.s32 %s58, 1
      %s60 = scalar_select %p57, %s58, %s59
      %p63 = pneg %p57
      %p64 = scmp.eq.s32.totalorder %s22, 1
      %p65 = por %p63, %p64
      %p66 = scmp.ne.s32.totalorder %s58, %s61
      %p67 = scmp.eq.s32.totalorder %s22, 0
      %p68 = por %p66, %p67
      %p69 = scmp.ne.s32.totalorder %s58, %s61
      %p70 = scmp.eq.s32.totalorder %s27, 1
      %p71 = por %p69, %p70
      %p72 = scmp.ne.s32.totalorder %s61, %s62
      %p73 = scmp.eq.s32.totalorder %s27, 0
      %p74 = por %p72, %p73
      %p75 = scmp.ne.s32.totalorder %s61, %s62
      %p76 = scmp.eq.s32.totalorder %s28, 1
      %p77 = por %p75, %p76
      %p79 = scmp.ne.s32.totalorder %s62, %s78
      %p80 = scmp.eq.s32.totalorder %s28, 0
      %p81 = por %p79, %p80
      %s82 = ssub.s32 %s22, %s29
      %p83 = scmp.eq.s32.totalorder %s82, 0
      %s85 = sadd.s32 %s84, 1
      %s86 = scalar_select %p83, %s84, %s85
      %p89 = pneg %p83
      %p90 = scmp.eq.s32.totalorder %s22, 1
      %p91 = por %p89, %p90
      %p92 = scmp.ne.s32.totalorder %s84, %s87
      %p93 = scmp.eq.s32.totalorder %s22, 0
      %p94 = por %p92, %p93
      %p95 = scmp.ne.s32.totalorder %s84, %s87
      %p96 = scmp.eq.s32.totalorder %s27, 1
      %p97 = por %p95, %p96
      %p98 = scmp.ne.s32.totalorder %s87, %s88
      %p99 = scmp.eq.s32.totalorder %s27, 0
      %p100 = por %p98, %p99
      %p101 = scmp.ne.s32.totalorder %s87, %s88
      %p102 = scmp.eq.s32.totalorder %s28, 1
      %p103 = por %p101, %p102
      %p105 = scmp.ne.s32.totalorder %s88, %s104
      %p106 = scmp.eq.s32.totalorder %s28, 0
      %p107 = por %p105, %p106
      %s109 = sadd.s32 %s108, 1
      %p112 = scmp.eq.s32.totalorder %s22, 1
      %p113 = scmp.ne.s32.totalorder %s108, %s110
      %p114 = scmp.eq.s32.totalorder %s22, 0
      %p115 = por %p113, %p114
      %p116 = scmp.ne.s32.totalorder %s108, %s110
      %p117 = scmp.eq.s32.totalorder %s27, 1
      %p118 = por %p116, %p117
      %p119 = scmp.ne.s32.totalorder %s110, %s111
      %p120 = scmp.eq.s32.totalorder %s27, 0
      %p121 = por %p119, %p120
      %p122 = scmp.ne.s32.totalorder %s110, %s111
      %p123 = scmp.eq.s32.totalorder %s28, 1
      %p124 = por %p122, %p123
      %p126 = scmp.ne.s32.totalorder %s111, %s125
      %p127 = scmp.eq.s32.totalorder %s28, 0
      %p128 = por %p126, %p127
      %s130 = sadd.s32 %s129, 1
      %p133 = scmp.eq.s32.totalorder %s22, 1
      %p134 = scmp.ne.s32.totalorder %s129, %s131
      %p135 = scmp.eq.s32.totalorder %s22, 0
      %p136 = por %p134, %p135
      %p137 = scmp.ne.s32.totalorder %s129, %s131
      %p138 = scmp.eq.s32.totalorder %s27, 1
      %p139 = por %p137, %p138
      %p140 = scmp.ne.s32.totalorder %s131, %s132
      %p141 = scmp.eq.s32.totalorder %s27, 0
      %p142 = por %p140, %p141
      %p143 = scmp.ne.s32.totalorder %s131, %s132
      %p144 = scmp.eq.s32.totalorder %s28, 1
      %p145 = por %p143, %p144
      %p147 = scmp.ne.s32.totalorder %s132, %s146
      %p148 = scmp.eq.s32.totalorder %s28, 0
      %p149 = por %p147, %p148
      %s151 = sadd.s32 %s150, 1
      %p154 = scmp.eq.s32.totalorder %s22, 1
      %p155 = scmp.ne.s32.totalorder %s150, %s152
      %p156 = scmp.eq.s32.totalorder %s22, 0
      %p157 = por %p155, %p156
      %p158 = scmp.ne.s32.totalorder %s150, %s152
      %p159 = scmp.eq.s32.totalorder %s27, 1
      %p160 = por %p158, %p159
      %p161 = scmp.ne.s32.totalorder %s152, %s153
      %p162 = scmp.eq.s32.totalorder %s27, 0
      %p163 = por %p161, %p162
      %p164 = scmp.ne.s32.totalorder %s152, %s153
      %p165 = scmp.eq.s32.totalorder %s28, 1
      %p166 = por %p164, %p165
      %p168 = scmp.ne.s32.totalorder %s153, %s167
      %p169 = scmp.eq.s32.totalorder %s28, 0
      %p170 = por %p168, %p169
      %s172 = sadd.s32 %s171, 1
      %p175 = scmp.eq.s32.totalorder %s22, 1
      %p176 = scmp.ne.s32.totalorder %s171, %s173
      %p177 = scmp.eq.s32.totalorder %s22, 0
      %p178 = por %p176, %p177
      %p179 = scmp.ne.s32.totalorder %s171, %s173
      %p180 = scmp.eq.s32.totalorder %s27, 1
      %p181 = por %p179, %p180
      %p182 = scmp.ne.s32.totalorder %s173, %s174
      %p183 = scmp.eq.s32.totalorder %s27, 0
      %p184 = por %p182, %p183
      %p185 = scmp.ne.s32.totalorder %s173, %s174
      %p186 = scmp.eq.s32.totalorder %s28, 1
      %p187 = por %p185, %p186
      %p189 = scmp.ne.s32.totalorder %s174, %s188
      %p190 = scmp.eq.s32.totalorder %s28, 0
      %p191 = por %p189, %p190
      %s193 = sadd.s32 %s192, 1
      %p196 = scmp.eq.s32.totalorder %s22, 1
      %p197 = scmp.ne.s32.totalorder %s192, %s194
      %p198 = scmp.eq.s32.totalorder %s22, 0
      %p199 = por %p197, %p198
      %p200 = scmp.ne.s32.totalorder %s192, %s194
      %p201 = scmp.eq.s32.totalorder %s27, 1
      %p202 = por %p200, %p201
      %p203 = scmp.ne.s32.totalorder %s194, %s195
      %p204 = scmp.eq.s32.totalorder %s27, 0
      %p205 = por %p203, %p204
      %p206 = scmp.ne.s32.totalorder %s194, %s195
      %p207 = scmp.eq.s32.totalorder %s28, 1
      %p208 = por %p206, %p207
      %p210 = scmp.ne.s32.totalorder %s195, %s209
      %p211 = scmp.eq.s32.totalorder %s28, 0
      %p212 = por %p210, %p211
      %s214 = sadd.s32 %s213, 1
      %p217 = scmp.eq.s32.totalorder %s22, 1
      %p218 = scmp.ne.s32.totalorder %s213, %s215
      %p219 = scmp.eq.s32.totalorder %s22, 0
      %p220 = por %p218, %p219
      %p221 = scmp.ne.s32.totalorder %s213, %s215
      %p222 = scmp.eq.s32.totalorder %s27, 1
      %p223 = por %p221, %p222
      %p224 = scmp.ne.s32.totalorder %s215, %s216
      %p225 = scmp.eq.s32.totalorder %s27, 0
      %p226 = por %p224, %p225
      %p227 = scmp.ne.s32.totalorder %s215, %s216
      %p228 = scmp.eq.s32.totalorder %s28, 1
      %p229 = por %p227, %p228
      %p231 = scmp.ne.s32.totalorder %s216, %s230
      %p232 = scmp.eq.s32.totalorder %s28, 0
      %p233 = por %p231, %p232
      %s235 = sadd.s32 %s234, 1
      %p238 = scmp.eq.s32.totalorder %s22, 1
      %p239 = scmp.ne.s32.totalorder %s234, %s236
      %p240 = scmp.eq.s32.totalorder %s22, 0
      %p241 = por %p239, %p240
      %p242 = scmp.ne.s32.totalorder %s234, %s236
      %p243 = scmp.eq.s32.totalorder %s27, 1
      %p244 = por %p242, %p243
      %p245 = scmp.ne.s32.totalorder %s236, %s237
      %p246 = scmp.eq.s32.totalorder %s27, 0
      %p247 = por %p245, %p246
      %p248 = scmp.ne.s32.totalorder %s236, %s237
      %p249 = scmp.eq.s32.totalorder %s28, 1
      %p250 = por %p248, %p249
      %p252 = scmp.ne.s32.totalorder %s237, %s251
      %p253 = scmp.eq.s32.totalorder %s28, 0
      %p254 = por %p252, %p253
      %s255 = ssub.s32 %s22, %s29
      %p256 = scmp.eq.s32.totalorder %s255, 0
      %s258 = sadd.s32 %s257, 1
      %s259 = scalar_select %p256, %s257, %s258
      %p262 = pneg %p256
      %p263 = scmp.eq.s32.totalorder %s22, 1
      %p264 = por %p262, %p263
      %p265 = scmp.ne.s32.totalorder %s257, %s260
      %p266 = scmp.eq.s32.totalorder %s22, 0
      %p267 = por %p265, %p266
      %p268 = scmp.ne.s32.totalorder %s257, %s260
      %p269 = scmp.eq.s32.totalorder %s27, 1
      %p270 = por %p268, %p269
      %p271 = scmp.ne.s32.totalorder %s260, %s261
      %p272 = scmp.eq.s32.totalorder %s27, 0
      %p273 = por %p271, %p272
      %p274 = scmp.ne.s32.totalorder %s260, %s261
      %p275 = scmp.eq.s32.totalorder %s28, 1
      %p276 = por %p274, %p275
      %p278 = scmp.ne.s32.totalorder %s261, %s277
      %p279 = scmp.eq.s32.totalorder %s28, 0
      %p280 = por %p278, %p279
      %s281 = ssub.s32 %s22, %s29
      %p282 = scmp.eq.s32.totalorder %s281, 0
      %s284 = sadd.s32 %s283, 1
      %s285 = scalar_select %p282, %s283, %s284
      %p288 = pneg %p282
      %p289 = scmp.eq.s32.totalorder %s22, 1
      %p290 = por %p288, %p289
      %p291 = scmp.ne.s32.totalorder %s283, %s286
      %p292 = scmp.eq.s32.totalorder %s22, 0
      %p293 = por %p291, %p292
      %p294 = scmp.ne.s32.totalorder %s283, %s286
      %p295 = scmp.eq.s32.totalorder %s27, 1
      %p296 = por %p294, %p295
      %p297 = scmp.ne.s32.totalorder %s286, %s287
      %p298 = scmp.eq.s32.totalorder %s27, 0
      %p299 = por %p297, %p298
      %p300 = scmp.ne.s32.totalorder %s286, %s287
      %p301 = scmp.eq.s32.totalorder %s28, 1
      %p302 = por %p300, %p301
      %p304 = scmp.ne.s32.totalorder %s287, %s303
      %p305 = scmp.eq.s32.totalorder %s28, 0
      %p306 = por %p304, %p305
      %p307 = scmp.le.s32.totalorder 1, %s22
      %p308 = scmp.lt.s32.totalorder %s22, 3
      %p309 = pnand %p307, %p308
      %p310 = pneg %p309
      // Predicated region
      $region9: #{tpu_custom_call.1} parent=5 // pred_check
        _
      $region10: #{tpu_custom_call.1} parent=5 // pred_check_branch
        %312 = sbr.rel (%p309) target = $region12
      $region11: #{tpu_custom_call.1} parent=5 // pred_region
        %s313 = ssub.s32 %s22, 1
        // Predicated region
        $region13: #{tpu_custom_call.1} parent=11 // pred_check
          %p314 = pneg %p121
        $region14: #{tpu_custom_call.1} parent=11 // pred_check_branch
          %316 = sbr.rel (%p314) target = $region16
        $region15: #{tpu_custom_call.1} parent=11 // pred_region
          %318 = vsyncadd [#allocation5], 0
          %s319 = sshll.u32 %s3, 4
          %s320 = int_to_ptr.hbm [resolvable:$true] %s319
          %s321 = sshll.u32 [#allocation4], 4
          %s322 = int_to_ptr.vmem [resolvable:$true] %s321
          %327 = dma.hbm_to_vmem [thread:$0]  %s320, 3072, %s322, [#allocation5], 192, 192, 12
        $region16: #{tpu_custom_call.1} parent=11 // pred_fallthru
          _
        // Predicated region
        $region17: #{tpu_custom_call.1} parent=11 // pred_check
          %p328 = pneg %p142
        $region18: #{tpu_custom_call.1} parent=11 // pred_check_branch
          %330 = sbr.rel (%p328) target = $region20
        $region19: #{tpu_custom_call.1} parent=11 // pred_region
          %332 = vsyncadd [#allocation7], 0
          %s333 = sshll.u32 %s4, 4
          %s334 = int_to_ptr.hbm [resolvable:$true] %s333
          %s335 = sshll.u32 [#allocation6], 4
          %s336 = int_to_ptr.vmem [resolvable:$true] %s335
          %341 = dma.hbm_to_vmem [thread:$0]  %s334, 3072, %s336, [#allocation7], 192, 192, 12
        $region20: #{tpu_custom_call.1} parent=11 // pred_fallthru
          _
        // Predicated region
        $region21: #{tpu_custom_call.1} parent=11 // pred_check
          %p342 = pneg %p163
        $region22: #{tpu_custom_call.1} parent=11 // pred_check_branch
          %344 = sbr.rel (%p342) target = $region24
        $region23: #{tpu_custom_call.1} parent=11 // pred_region
          %346 = vsyncadd [#allocation7], 0
          %s347 = sshll.u32 %s5, 4
          %s348 = int_to_ptr.hbm [resolvable:$true] %s347
          %s349 = sshll.u32 [#allocation8], 4
          %s350 = int_to_ptr.vmem [resolvable:$true] %s349
          %355 = dma.hbm_to_vmem [thread:$0]  %s348, 1024, %s350, [#allocation7], 64, 64, 4
        $region24: #{tpu_custom_call.1} parent=11 // pred_fallthru
          _
        // Predicated region
        $region25: #{tpu_custom_call.1} parent=11 // pred_check
          %p356 = pneg %p184
        $region26: #{tpu_custom_call.1} parent=11 // pred_check_branch
          %358 = sbr.rel (%p356) target = $region28
        $region27: #{tpu_custom_call.1} parent=11 // pred_region
          %360 = vsyncadd [#allocation10], 0
          %s361 = sshll.u32 %s6, 4
          %s362 = int_to_ptr.hbm [resolvable:$true] %s361
          %s363 = sshll.u32 [#allocation9], 4
          %s364 = int_to_ptr.vmem [resolvable:$true] %s363
          %369 = dma.hbm_to_vmem [thread:$0]  %s362, 1024, %s364, [#allocation10], 64, 64, 4
        $region28: #{tpu_custom_call.1} parent=11 // pred_fallthru
          _
        // Predicated region
        $region29: #{tpu_custom_call.1} parent=11 // pred_check
          %p370 = pneg %p205
        $region30: #{tpu_custom_call.1} parent=11 // pred_check_branch
          %372 = sbr.rel (%p370) target = $region32
        $region31: #{tpu_custom_call.1} parent=11 // pred_region
          %374 = vsyncadd [#allocation10], 0
          %s375 = sshll.u32 %s7, 4
          %s376 = int_to_ptr.hbm [resolvable:$true] %s375
          %s377 = sshll.u32 [#allocation11], 4
          %s378 = int_to_ptr.vmem [resolvable:$true] %s377
          %383 = dma.hbm_to_vmem [thread:$0]  %s376, 4096, %s378, [#allocation10], 256, 256, 16
        $region32: #{tpu_custom_call.1} parent=11 // pred_fallthru
          _
        // Predicated region
        $region33: #{tpu_custom_call.1} parent=11 // pred_check
          %p384 = pneg %p226
        $region34: #{tpu_custom_call.1} parent=11 // pred_check_branch
          %386 = sbr.rel (%p384) target = $region36
        $region35: #{tpu_custom_call.1} parent=11 // pred_region
          %388 = vsyncadd [#allocation13], 0
          %s389 = sshll.u32 %s8, 4
          %s390 = int_to_ptr.hbm [resolvable:$true] %s389
          %s391 = sshll.u32 [#allocation12], 4
          %s392 = int_to_ptr.vmem [resolvable:$true] %s391
          %397 = dma.hbm_to_vmem [thread:$0]  %s390, 4096, %s392, [#allocation13], 64, 64, 4
        $region36: #{tpu_custom_call.1} parent=11 // pred_fallthru
          _
        // Predicated region
        $region37: #{tpu_custom_call.1} parent=11 // pred_check
          %p398 = pneg %p247
        $region38: #{tpu_custom_call.1} parent=11 // pred_check_branch
          %400 = sbr.rel (%p398) target = $region40
        $region39: #{tpu_custom_call.1} parent=11 // pred_region
          %402 = vsyncadd [#allocation13], 0
          %s403 = sshll.u32 %s9, 4
          %s404 = int_to_ptr.hbm [resolvable:$true] %s403
          %s405 = sshll.u32 [#allocation14], 4
          %s406 = int_to_ptr.vmem [resolvable:$true] %s405
          %411 = dma.hbm_to_vmem [thread:$0]  %s404, 2048, %s406, [#allocation13], 128, 128, 8
        $region40: #{tpu_custom_call.1} parent=11 // pred_fallthru
          _
      $region12: #{tpu_custom_call.1} parent=5 // pred_fallthru
        _
      %p412 = scmp.lt.s32.totalorder %s22, 2
      // Predicated region
      $region41: #{tpu_custom_call.1} parent=5 // pred_check
        %p413 = pneg %p412
      $region42: #{tpu_custom_call.1} parent=5 // pred_check_branch
        %415 = sbr.rel (%p413) target = $region44
      $region43: #{tpu_custom_call.1} parent=5 // pred_region
        // Predicated region
        $region45: #{tpu_custom_call.1} parent=43 // pred_check
          %p416 = pneg %p42
        $region46: #{tpu_custom_call.1} parent=43 // pred_check_branch
          %418 = sbr.rel (%p416) target = $region48
        $region47: #{tpu_custom_call.1} parent=43 // pred_region
          %p419 = scmp.lt.s32.totalorder %s22, 1
          %s420 = scalar_select %p419, %s22, 1
          %s421 = smul.addr %s420, 8
          %s422 = scalar_lea.vmem %s0, %s421
        $region48: #{tpu_custom_call.1} parent=43 // pred_fallthru
          _
        // Predicated region
        $region49: #{tpu_custom_call.1} parent=43 // pred_check
          %p423 = pneg %p68
        $region50: #{tpu_custom_call.1} parent=43 // pred_check_branch
          %425 = sbr.rel (%p423) target = $region52
        $region51: #{tpu_custom_call.1} parent=43 // pred_region
          %p426 = scmp.lt.s32.totalorder %s22, 1
          %s427 = scalar_select %p426, %s22, 1
          %s428 = smul.addr %s427, 8
          %s429 = scalar_lea.vmem %s1, %s428
        $region52: #{tpu_custom_call.1} parent=43 // pred_fallthru
          _
        // Predicated region
        $region53: #{tpu_custom_call.1} parent=43 // pred_check
          %p430 = pneg %p94
        $region54: #{tpu_custom_call.1} parent=43 // pred_check_branch
          %432 = sbr.rel (%p430) target = $region56
        $region55: #{tpu_custom_call.1} parent=43 // pred_region
          %p433 = scmp.lt.s32.totalorder %s22, 1
          %s434 = scalar_select %p433, %s22, 1
          %s435 = smul.addr %s434, 8
          %s436 = scalar_lea.vmem %s2, %s435
        $region56: #{tpu_custom_call.1} parent=43 // pred_fallthru
          _
      $region44: #{tpu_custom_call.1} parent=5 // pred_fallthru
        _
      %p437 = scmp.le.s32.totalorder 1, %s22
      %p438 = scmp.lt.s32.totalorder %s22, 3
      %p439 = pnand %p437, %p438
      %p440 = pneg %p439
      // Predicated region
      $region57: #{tpu_custom_call.1} parent=5 // pred_check
        _
      $region58: #{tpu_custom_call.1} parent=5 // pred_check_branch
        %442 = sbr.rel (%p439) target = $region60
      $region59: #{tpu_custom_call.1} parent=5 // pred_region
        %s443 = ssub.s32 %s22, 1
        // Predicated region
        $region61: #{tpu_custom_call.1} parent=59 // pred_check
          %p444 = pneg %p121
        $region62: #{tpu_custom_call.1} parent=59 // pred_check_branch
          %446 = sbr.rel (%p444) target = $region64
        $region63: #{tpu_custom_call.1} parent=59 // pred_region
          %448 = dma.done [#allocation5], 3072
        $region64: #{tpu_custom_call.1} parent=59 // pred_fallthru
          _
        // Predicated region
        $region65: #{tpu_custom_call.1} parent=59 // pred_check
          %p449 = pneg %p142
        $region66: #{tpu_custom_call.1} parent=59 // pred_check_branch
          %451 = sbr.rel (%p449) target = $region68
        $region67: #{tpu_custom_call.1} parent=59 // pred_region
          %453 = dma.done [#allocation7], 3072
        $region68: #{tpu_custom_call.1} parent=59 // pred_fallthru
          _
        // Predicated region
        $region69: #{tpu_custom_call.1} parent=59 // pred_check
          %p454 = pneg %p163
        $region70: #{tpu_custom_call.1} parent=59 // pred_check_branch
          %456 = sbr.rel (%p454) target = $region72
        $region71: #{tpu_custom_call.1} parent=59 // pred_region
          %458 = dma.done [#allocation7], 1024
        $region72: #{tpu_custom_call.1} parent=59 // pred_fallthru
          _
        // Predicated region
        $region73: #{tpu_custom_call.1} parent=59 // pred_check
          %p459 = pneg %p184
        $region74: #{tpu_custom_call.1} parent=59 // pred_check_branch
          %461 = sbr.rel (%p459) target = $region76
        $region75: #{tpu_custom_call.1} parent=59 // pred_region
          %463 = dma.done [#allocation10], 1024
        $region76: #{tpu_custom_call.1} parent=59 // pred_fallthru
          _
        // Predicated region
        $region77: #{tpu_custom_call.1} parent=59 // pred_check
          %p464 = pneg %p205
        $region78: #{tpu_custom_call.1} parent=59 // pred_check_branch
          %466 = sbr.rel (%p464) target = $region80
        $region79: #{tpu_custom_call.1} parent=59 // pred_region
          %468 = dma.done [#allocation10], 4096
        $region80: #{tpu_custom_call.1} parent=59 // pred_fallthru
          _
        // Predicated region
        $region81: #{tpu_custom_call.1} parent=59 // pred_check
          %p469 = pneg %p226
        $region82: #{tpu_custom_call.1} parent=59 // pred_check_branch
          %471 = sbr.rel (%p469) target = $region84
        $region83: #{tpu_custom_call.1} parent=59 // pred_region
          %473 = dma.done [#allocation13], 4096
        $region84: #{tpu_custom_call.1} parent=59 // pred_fallthru
          _
        // Predicated region
        $region85: #{tpu_custom_call.1} parent=59 // pred_check
          %p474 = pneg %p247
        $region86: #{tpu_custom_call.1} parent=59 // pred_check_branch
          %476 = sbr.rel (%p474) target = $region88
        $region87: #{tpu_custom_call.1} parent=59 // pred_region
          %478 = dma.done [#allocation13], 2048
        $region88: #{tpu_custom_call.1} parent=59 // pred_fallthru
          _
        %p479 = scmp.lt.s32.totalorder %s27, 1
        %s480 = scalar_select %p479, %s27, 1
        %s481 = smul.addr %s480, 8
        %s482 = scalar_lea.vmem %s0, %s481
        %p483 = pneg %p48
        %p484 = pneg %p45
        %p485 = scmp.lt.s32.totalorder %s27, 1
        %s486 = scalar_select %p485, %s27, 1
        %s487 = smul.addr %s486, 8
        %s488 = scalar_lea.vmem %s1, %s487
        %p489 = pneg %p74
        %p490 = pneg %p71
        %p491 = scmp.lt.s32.totalorder %s27, 1
        %s492 = scalar_select %p491, %s27, 1
        %s493 = smul.addr %s492, 8
        %s494 = scalar_lea.vmem %s2, %s493
        %p495 = pneg %p100
        %p496 = pneg %p97
        %p497 = pneg %p121
        %p498 = pneg %p118
        %p499 = pneg %p142
        %p500 = pneg %p139
        %p501 = pneg %p163
        %p502 = pneg %p160
        %p503 = pneg %p184
        %p504 = pneg %p181
        %p505 = pneg %p205
        %p506 = pneg %p202
        %p507 = pneg %p226
        %p508 = pneg %p223
        %p509 = pneg %p247
        %p510 = pneg %p244
        %p511 = pneg %p273
        %p512 = pneg %p270
        %p513 = scmp.lt.s32.totalorder %s27, 1
        %s514 = scalar_select %p513, %s27, 1
        %s515 = scalar_lea.vmem %s10, %s514
        %p516 = pneg %p299
        %p517 = pneg %p296
        %p518 = scmp.lt.s32.totalorder %s27, 1
        %s519 = scalar_select %p518, %s27, 1
        %s520 = scalar_lea.vmem %s11, %s519
        %p521 = scmp.lt.s32.totalorder %s27, 1
        %s522 = scalar_select %p521, %s27, 1
        %s523 = smul.addr %s522, 8
        %s524 = scalar_lea.vmem %s0, %s523
        %p525 = scmp.lt.s32.totalorder %s27, 1
        %s526 = scalar_select %p525, %s27, 1
        %s527 = smul.addr %s526, 8
        %s528 = scalar_lea.vmem %s1, %s527
        %p529 = scmp.lt.s32.totalorder %s27, 1
        %s530 = scalar_select %p529, %s27, 1
        %s531 = smul.addr %s530, 8
        %s532 = scalar_lea.vmem %s2, %s531
        %p533 = scmp.lt.s32.totalorder %s27, 1
        %s534 = scalar_select %p533, %s27, 1
        %s535 = scalar_lea.vmem %s10, %s534
        %p536 = scmp.lt.s32.totalorder %s27, 1
        %s537 = scalar_select %p536, %s27, 1
        %s538 = scalar_lea.vmem %s11, %s537
        %540 = vst [vmem:[#allocation2] sm:$0xf] 0
        %541 = vst [vmem:[#allocation2 + $0x4] sm:$0xf] 0
        %542 = vst [vmem:[#allocation3] sm:$0xf] 0
        %543 = vst [vmem:[#allocation3 + $0x4] sm:$0xf] 0
        %v544 = vld [vmem:[#allocation4] sm:$0xff]
        %v545 = vld [vmem:[#allocation4 + $0x8] sm:$0xf]
        %v546 = vld [vmem:[#allocation4 + $0xc] sm:$0xff]
        %v547 = vld [vmem:[#allocation4 + $0x14] sm:$0xf]
        %v548 = vld [vmem:[#allocation4 + $0x18] sm:$0xff]
        %v549 = vld [vmem:[#allocation4 + $0x20] sm:$0xf]
        %v550 = vld [vmem:[#allocation4 + $0x24] sm:$0xff]
        %v551 = vld [vmem:[#allocation4 + $0x2c] sm:$0xf]
        %v552 = vld [vmem:[#allocation4 + $0x30] sm:$0xff]
        %v553 = vld [vmem:[#allocation4 + $0x38] sm:$0xf]
        %v554 = vld [vmem:[#allocation4 + $0x3c] sm:$0xff]
        %v555 = vld [vmem:[#allocation4 + $0x44] sm:$0xf]
        %v556 = vld [vmem:[#allocation4 + $0x48] sm:$0xff]
        %v557 = vld [vmem:[#allocation4 + $0x50] sm:$0xf]
        %v558 = vld [vmem:[#allocation4 + $0x54] sm:$0xff]
        %v559 = vld [vmem:[#allocation4 + $0x5c] sm:$0xf]
        %v560 = vld [vmem:[#allocation4 + $0x60] sm:$0xff]
        %v561 = vld [vmem:[#allocation4 + $0x68] sm:$0xf]
        %v562 = vld [vmem:[#allocation4 + $0x6c] sm:$0xff]
        %v563 = vld [vmem:[#allocation4 + $0x74] sm:$0xf]
        %v564 = vld [vmem:[#allocation4 + $0x78] sm:$0xff]
        %v565 = vld [vmem:[#allocation4 + $0x80] sm:$0xf]
        %v566 = vld [vmem:[#allocation4 + $0x84] sm:$0xff]
        %v567 = vld [vmem:[#allocation4 + $0x8c] sm:$0xf]
        %v568 = vld [vmem:[#allocation4 + $0x90] sm:$0xff]
        %v569 = vld [vmem:[#allocation4 + $0x98] sm:$0xf]
        %v570 = vld [vmem:[#allocation4 + $0x9c] sm:$0xff]
        %v571 = vld [vmem:[#allocation4 + $0xa4] sm:$0xf]
        %v572 = vld [vmem:[#allocation4 + $0xa8] sm:$0xff]
        %v573 = vld [vmem:[#allocation4 + $0xb0] sm:$0xf]
        %v574 = vld [vmem:[#allocation4 + $0xb4] sm:$0xff]
        %v575 = vld [vmem:[#allocation4 + $0xbc] sm:$0xf]
        %v576 = vld [vmem:[#allocation9] sm:$0xf]
        %v577 = vld [vmem:[#allocation9 + $0x4] sm:$0xf]
        %v578 = vld [vmem:[#allocation9 + $0x8] sm:$0xf]
        %v579 = vld [vmem:[#allocation9 + $0xc] sm:$0xf]
        %v580 = vld [vmem:[#allocation9 + $0x10] sm:$0xf]
        %v581 = vld [vmem:[#allocation9 + $0x14] sm:$0xf]
        %v582 = vld [vmem:[#allocation9 + $0x18] sm:$0xf]
        %v583 = vld [vmem:[#allocation9 + $0x1c] sm:$0xf]
        %v584 = vld [vmem:[#allocation9 + $0x20] sm:$0xf]
        %v585 = vld [vmem:[#allocation9 + $0x24] sm:$0xf]
        %v586 = vld [vmem:[#allocation9 + $0x28] sm:$0xf]
        %v587 = vld [vmem:[#allocation9 + $0x2c] sm:$0xf]
        %v588 = vld [vmem:[#allocation9 + $0x30] sm:$0xf]
        %v589 = vld [vmem:[#allocation9 + $0x34] sm:$0xf]
        %v590 = vld [vmem:[#allocation9 + $0x38] sm:$0xf]
        %v591 = vld [vmem:[#allocation9 + $0x3c] sm:$0xf]
        %v592 = vld [vmem:[#allocation11] sm:$0xff]
        %v593 = vld [vmem:[#allocation11 + $0x8] sm:$0xff]
        %v594 = vld [vmem:[#allocation11 + $0x10] sm:$0xff]
        %v595 = vld [vmem:[#allocation11 + $0x18] sm:$0xff]
        %v596 = vld [vmem:[#allocation11 + $0x20] sm:$0xff]
        %v597 = vld [vmem:[#allocation11 + $0x28] sm:$0xff]
        %v598 = vld [vmem:[#allocation11 + $0x30] sm:$0xff]
        %v599 = vld [vmem:[#allocation11 + $0x38] sm:$0xff]
        %v600 = vld [vmem:[#allocation11 + $0x40] sm:$0xff]
        %v601 = vld [vmem:[#allocation11 + $0x48] sm:$0xff]
        %v602 = vld [vmem:[#allocation11 + $0x50] sm:$0xff]
        %v603 = vld [vmem:[#allocation11 + $0x58] sm:$0xff]
        %v604 = vld [vmem:[#allocation11 + $0x60] sm:$0xff]
        %v605 = vld [vmem:[#allocation11 + $0x68] sm:$0xff]
        %v606 = vld [vmem:[#allocation11 + $0x70] sm:$0xff]
        %v607 = vld [vmem:[#allocation11 + $0x78] sm:$0xff]
        %v608 = vld [vmem:[#allocation11 + $0x80] sm:$0xff]
        %v609 = vld [vmem:[#allocation11 + $0x88] sm:$0xff]
        %v610 = vld [vmem:[#allocation11 + $0x90] sm:$0xff]
        %v611 = vld [vmem:[#allocation11 + $0x98] sm:$0xff]
        %v612 = vld [vmem:[#allocation11 + $0xa0] sm:$0xff]
        %v613 = vld [vmem:[#allocation11 + $0xa8] sm:$0xff]
        %v614 = vld [vmem:[#allocation11 + $0xb0] sm:$0xff]
        %v615 = vld [vmem:[#allocation11 + $0xb8] sm:$0xff]
        %v616 = vld [vmem:[#allocation11 + $0xc0] sm:$0xff]
        %v617 = vld [vmem:[#allocation11 + $0xc8] sm:$0xff]
        %v618 = vld [vmem:[#allocation11 + $0xd0] sm:$0xff]
        %v619 = vld [vmem:[#allocation11 + $0xd8] sm:$0xff]
        %v620 = vld [vmem:[#allocation11 + $0xe0] sm:$0xff]
        %v621 = vld [vmem:[#allocation11 + $0xe8] sm:$0xff]
        %v622 = vld [vmem:[#allocation11 + $0xf0] sm:$0xff]
        %v623 = vld [vmem:[#allocation11 + $0xf8] sm:$0xff]
        %v624 = vld [vmem:[#allocation12] sm:$0xf]
        %v625 = vld [vmem:[#allocation12 + $0x4] sm:$0xf]
        %v626 = vld [vmem:[#allocation12 + $0x8] sm:$0xf]
        %v627 = vld [vmem:[#allocation12 + $0xc] sm:$0xf]
        %v628 = vld [vmem:[#allocation12 + $0x10] sm:$0xf]
        %v629 = vld [vmem:[#allocation12 + $0x14] sm:$0xf]
        %v630 = vld [vmem:[#allocation12 + $0x18] sm:$0xf]
        %v631 = vld [vmem:[#allocation12 + $0x1c] sm:$0xf]
        %v632 = vld [vmem:[#allocation12 + $0x20] sm:$0xf]
        %v633 = vld [vmem:[#allocation12 + $0x24] sm:$0xf]
        %v634 = vld [vmem:[#allocation12 + $0x28] sm:$0xf]
        %v635 = vld [vmem:[#allocation12 + $0x2c] sm:$0xf]
        %v636 = vld [vmem:[#allocation12 + $0x30] sm:$0xf]
        %v637 = vld [vmem:[#allocation12 + $0x34] sm:$0xf]
        %v638 = vld [vmem:[#allocation12 + $0x38] sm:$0xf]
        %v639 = vld [vmem:[#allocation12 + $0x3c] sm:$0xf]
        %v640 = vld [vmem:[#allocation12 + $0x40] sm:$0xf]
        %v641 = vld [vmem:[#allocation12 + $0x44] sm:$0xf]
        %v642 = vld [vmem:[#allocation12 + $0x48] sm:$0xf]
        %v643 = vld [vmem:[#allocation12 + $0x4c] sm:$0xf]
        %v644 = vld [vmem:[#allocation12 + $0x50] sm:$0xf]
        %v645 = vld [vmem:[#allocation12 + $0x54] sm:$0xf]
        %v646 = vld [vmem:[#allocation12 + $0x58] sm:$0xf]
        %v647 = vld [vmem:[#allocation12 + $0x5c] sm:$0xf]
        %v648 = vld [vmem:[#allocation12 + $0x60] sm:$0xf]
        %v649 = vld [vmem:[#allocation12 + $0x64] sm:$0xf]
        %v650 = vld [vmem:[#allocation12 + $0x68] sm:$0xf]
        %v651 = vld [vmem:[#allocation12 + $0x6c] sm:$0xf]
        %v652 = vld [vmem:[#allocation12 + $0x70] sm:$0xf]
        %v653 = vld [vmem:[#allocation12 + $0x74] sm:$0xf]
        %v654 = vld [vmem:[#allocation12 + $0x78] sm:$0xf]
        %v655 = vld [vmem:[#allocation12 + $0x7c] sm:$0xf]
        %v656 = vld [vmem:[#allocation12 + $0x80] sm:$0xf]
        %v657 = vld [vmem:[#allocation12 + $0x84] sm:$0xf]
        %v658 = vld [vmem:[#allocation12 + $0x88] sm:$0xf]
        %v659 = vld [vmem:[#allocation12 + $0x8c] sm:$0xf]
        %v660 = vld [vmem:[#allocation12 + $0x90] sm:$0xf]
        %v661 = vld [vmem:[#allocation12 + $0x94] sm:$0xf]
        %v662 = vld [vmem:[#allocation12 + $0x98] sm:$0xf]
        %v663 = vld [vmem:[#allocation12 + $0x9c] sm:$0xf]
        %v664 = vld [vmem:[#allocation12 + $0xa0] sm:$0xf]
        %v665 = vld [vmem:[#allocation12 + $0xa4] sm:$0xf]
        %v666 = vld [vmem:[#allocation12 + $0xa8] sm:$0xf]
        %v667 = vld [vmem:[#allocation12 + $0xac] sm:$0xf]
        %v668 = vld [vmem:[#allocation12 + $0xb0] sm:$0xf]
        %v669 = vld [vmem:[#allocation12 + $0xb4] sm:$0xf]
        %v670 = vld [vmem:[#allocation12 + $0xb8] sm:$0xf]
        %v671 = vld [vmem:[#allocation12 + $0xbc] sm:$0xf]
        %v672 = vld [vmem:[#allocation12 + $0xc0] sm:$0xf]
        %v673 = vld [vmem:[#allocation12 + $0xc4] sm:$0xf]
        %v674 = vld [vmem:[#allocation12 + $0xc8] sm:$0xf]
        %v675 = vld [vmem:[#allocation12 + $0xcc] sm:$0xf]
        %v676 = vld [vmem:[#allocation12 + $0xd0] sm:$0xf]
        %v677 = vld [vmem:[#allocation12 + $0xd4] sm:$0xf]
        %v678 = vld [vmem:[#allocation12 + $0xd8] sm:$0xf]
        %v679 = vld [vmem:[#allocation12 + $0xdc] sm:$0xf]
        %v680 = vld [vmem:[#allocation12 + $0xe0] sm:$0xf]
        %v681 = vld [vmem:[#allocation12 + $0xe4] sm:$0xf]
        %v682 = vld [vmem:[#allocation12 + $0xe8] sm:$0xf]
        %v683 = vld [vmem:[#allocation12 + $0xec] sm:$0xf]
        %v684 = vld [vmem:[#allocation12 + $0xf0] sm:$0xf]
        %v685 = vld [vmem:[#allocation12 + $0xf4] sm:$0xf]
        %v686 = vld [vmem:[#allocation12 + $0xf8] sm:$0xf]
        %v687 = vld [vmem:[#allocation12 + $0xfc] sm:$0xf]
        %v688 = vld [vmem:[%s524] sm:$0x3f]
        %v689 = vpack.c.bf16 %v688, %v688
        %v722 = vunpack.c.l.b16 %v544
        %v723 = vunpack.c.h.b16 %v544
        %v724 = vunpack.c.l.b16 %v545
        %v725 = vunpack.c.l.b16 %v546
        %v726 = vunpack.c.h.b16 %v546
        %v727 = vunpack.c.l.b16 %v547
        %v728 = vunpack.c.l.b16 %v548
        %v729 = vunpack.c.h.b16 %v548
        %v730 = vunpack.c.l.b16 %v549
        %v731 = vunpack.c.l.b16 %v550
        %v732 = vunpack.c.h.b16 %v550
        %v733 = vunpack.c.l.b16 %v551
        %v734 = vunpack.c.l.b16 %v552
        %v735 = vunpack.c.h.b16 %v552
        %v736 = vunpack.c.l.b16 %v553
        %v737 = vunpack.c.l.b16 %v554
        %v738 = vunpack.c.h.b16 %v554
        %v739 = vunpack.c.l.b16 %v555
        %v740 = vunpack.c.l.b16 %v556
        %v741 = vunpack.c.h.b16 %v556
        %v742 = vunpack.c.l.b16 %v557
        %v743 = vunpack.c.l.b16 %v558
        %v744 = vunpack.c.h.b16 %v558
        %v745 = vunpack.c.l.b16 %v559
        %v746 = vunpack.c.l.b16 %v560
        %v747 = vunpack.c.h.b16 %v560
        %v748 = vunpack.c.l.b16 %v561
        %v749 = vunpack.c.l.b16 %v562
        %v750 = vunpack.c.h.b16 %v562
        %v751 = vunpack.c.l.b16 %v563
        %v752 = vunpack.c.l.b16 %v564
        %v753 = vunpack.c.h.b16 %v564
        %v754 = vunpack.c.l.b16 %v565
        %v755 = vunpack.c.l.b16 %v566
        %v756 = vunpack.c.h.b16 %v566
        %v757 = vunpack.c.l.b16 %v567
        %v758 = vunpack.c.l.b16 %v568
        %v759 = vunpack.c.h.b16 %v568
        %v760 = vunpack.c.l.b16 %v569
        %v761 = vunpack.c.l.b16 %v570
        %v762 = vunpack.c.h.b16 %v570
        %v763 = vunpack.c.l.b16 %v571
        %v764 = vunpack.c.l.b16 %v572
        %v765 = vunpack.c.h.b16 %v572
        %v766 = vunpack.c.l.b16 %v573
        %v767 = vunpack.c.l.b16 %v574
        %v768 = vunpack.c.h.b16 %v574
        %v769 = vunpack.c.l.b16 %v575
        %v770 = vpack.c.b16 %v725, %v722
        %v771 = vpack.c.b16 %v726, %v723
        %v772 = vpack.c.b16 %v727, %v724
        %v773 = vpack.c.b16 %v731, %v728
        %v774 = vpack.c.b16 %v732, %v729
        %v775 = vpack.c.b16 %v733, %v730
        %v776 = vpack.c.b16 %v737, %v734
        %v777 = vpack.c.b16 %v738, %v735
        %v778 = vpack.c.b16 %v739, %v736
        %v779 = vpack.c.b16 %v743, %v740
        %v780 = vpack.c.b16 %v744, %v741
        %v781 = vpack.c.b16 %v745, %v742
        %v782 = vpack.c.b16 %v749, %v746
        %v783 = vpack.c.b16 %v750, %v747
        %v784 = vpack.c.b16 %v751, %v748
        %v785 = vpack.c.b16 %v755, %v752
        %v786 = vpack.c.b16 %v756, %v753
        %v787 = vpack.c.b16 %v757, %v754
        %v788 = vpack.c.b16 %v761, %v758
        %v789 = vpack.c.b16 %v762, %v759
        %v790 = vpack.c.b16 %v763, %v760
        %v791 = vpack.c.b16 %v767, %v764
        %v792 = vpack.c.b16 %v768, %v765
        %v793 = vpack.c.b16 %v769, %v766
        %818 = vmatpush.bf16.msra.mxu0 %v791
        %819 = vmatpush.bf16.msra.mxu0 %v788
        %820 = vmatpush.bf16.msra.mxu0 %v785
        %821 = vmatpush.bf16.msra.mxu0 %v782
        %822 = vmatpush.bf16.msra.mxu0 %v779
        %823 = vmatpush.bf16.msra.mxu0 %v776
        %824 = vmatpush.bf16.msra.mxu0 %v773
        %825 = vmatpush.bf16.msra.mxu0 %v770
        %826 = vmatmul.bf16.gmra.mxu0 %v689
        %v827 = vpop.f32.mrf.mxu0
        %v828 = vadd.f32 0.0, %v827
        %v829 = vpop.f32.mrf.mxu0
        %830 = vdwg.mxu0
        %831 = vmatpush.bf16.msra.mxu0 %v792
        %832 = vmatpush.bf16.msra.mxu0 %v789
        %833 = vmatpush.bf16.msra.mxu0 %v786
        %834 = vmatpush.bf16.msra.mxu0 %v783
        %835 = vmatpush.bf16.msra.mxu0 %v780
        %836 = vmatpush.bf16.msra.mxu0 %v777
        %837 = vmatpush.bf16.msra.mxu0 %v774
        %838 = vmatpush.bf16.msra.mxu0 %v771
        %839 = vmatmul.bf16.gmra.mxu0 %v689
        %v840 = vpop.f32.mrf.mxu0
        %v841 = vadd.f32 0.0, %v840
        %v842 = vpop.f32.mrf.mxu0
        %843 = vdwg.mxu0
        %844 = vmatpush.bf16.msra.mxu0 %v793
        %845 = vmatpush.bf16.msra.mxu0 %v790
        %846 = vmatpush.bf16.msra.mxu0 %v787
        %847 = vmatpush.bf16.msra.mxu0 %v784
        %848 = vmatpush.bf16.msra.mxu0 %v781
        %849 = vmatpush.bf16.msra.mxu0 %v778
        %850 = vmatpush.bf16.msra.mxu0 %v775
        %851 = vmatpush.bf16.msra.mxu0 %v772
        %852 = vmatmul.bf16.gmra.mxu0 %v689
        %v853 = vpop.f32.mrf.mxu0
        %v854 = vadd.f32 0.0, %v853
        %v855 = vpop.f32.mrf.mxu0
        %856 = vdwg.mxu0
        %v857 = vpack.c.bf16 %v841, %v841
        %858 = vst [vmem:[#allocation2] sm:$0x7] %v857
        %v859 = vpack.c.bf16 %v854, %v854
        %860 = vst [vmem:[#allocation3] sm:$0x7] %v859
        %v861 = vld [vmem:[#allocation2] sm:$0xf]
        %v862 = vld [vmem:[#allocation3] sm:$0xf]
        %v863 = vpack.c.bf16 %v828, %v828
        %864 = vmatpush.bf16.xpose.msra.mxu0 0
        %865 = vmatpush.bf16.xpose.msra.mxu0 0
        %866 = vmatpush.bf16.xpose.msra.mxu0 0
        %867 = vmatpush.bf16.xpose.msra.mxu0 0
        %868 = vmatpush.bf16.xpose.msra.mxu0 0
        %869 = vmatpush.bf16.xpose.msra.mxu0 0
        %870 = vmatpush.bf16.xpose.msra.mxu0 0
        %871 = vmatpush.bf16.xpose.msra.mxu0 %v861
        %872 = vmatmul.bf16.gmra.mxu0 %v863
        %v873 = vpop.f32.mrf.mxu0
        %v874 = vadd.f32 0.0, %v873
        %v875 = vpop.f32.mrf.mxu0
        %876 = vdwg.mxu0
        %v877 = vlaneseq
        %v878 = vshrl.u32 %v877, 7
        %v879 = vlaneseq
        %v880 = vand.u32 %v879, 127
        %vm881 = vcmp.le.s32.totalorder %v880, %v878
        %vm882 = vcmp.lt.s32.totalorder %v880, 6
        %vm883 = vmand %vm881, %vm882
        %v884 = vsel %vm883, %v874, -1e+30
        %vm885 = vcmask 62464
        %v886 = vsel %vm885, %v884, -inf
        %887 = vmax.xlane.f32.xlu0 %v886
        %v888 = vpop.xlane.xlu0 %887
        %v889 = vsub.f32 %v884, %v888
        %v890 = vmul.f32 %v889, 1.442695
        %v891 = vpow.pop %v890
        %v892 = vsel %vm885, %v891, 0.0
        %893 = vadd.xlane.f32.xlu0 %v892
        %v894 = vpop.xlane.xlu0 %893
        %v895 = vrcp.pop %v894
        %v896 = vmul.f32 %v891, %v895
        %v897 = vpack.c.bf16 %v896, %v896
        %vm898 = vcmask 64512
        %v900 = vsel %vm898, %v897, 0
        %vm902 = vcmask 1043456
        %v904 = vsel %vm902, %v862, 0
        %906 = vmatpush.bf16.msra.mxu0 0
        %907 = vmatpush.bf16.msra.mxu0 0
        %908 = vmatpush.bf16.msra.mxu0 0
        %909 = vmatpush.bf16.msra.mxu0 0
        %910 = vmatpush.bf16.msra.mxu0 0
        %911 = vmatpush.bf16.msra.mxu0 0
        %912 = vmatpush.bf16.msra.mxu0 0
        %913 = vmatpush.bf16.msra.mxu0 %v904
        %914 = vmatmul.bf16.gmra.mxu0 %v900
        %v915 = vpop.f32.mrf.mxu0
        %v916 = vadd.f32 0.0, %v915
        %v917 = vpop.f32.mrf.mxu0
        %918 = vdwg.mxu0
        %v919 = vpack.c.bf16 %v916, %v916
        %v936 = vunpack.c.l.b16 %v576
        %v937 = vunpack.c.l.b16 %v577
        %v938 = vunpack.c.l.b16 %v578
        %v939 = vunpack.c.l.b16 %v579
        %v940 = vunpack.c.l.b16 %v580
        %v941 = vunpack.c.l.b16 %v581
        %v942 = vunpack.c.l.b16 %v582
        %v943 = vunpack.c.l.b16 %v583
        %v944 = vunpack.c.l.b16 %v584
        %v945 = vunpack.c.l.b16 %v585
        %v946 = vunpack.c.l.b16 %v586
        %v947 = vunpack.c.l.b16 %v587
        %v948 = vunpack.c.l.b16 %v588
        %v949 = vunpack.c.l.b16 %v589
        %v950 = vunpack.c.l.b16 %v590
        %v951 = vunpack.c.l.b16 %v591
        %v952 = vpack.c.b16 %v937, %v936
        %v953 = vpack.c.b16 %v939, %v938
        %v954 = vpack.c.b16 %v941, %v940
        %v955 = vpack.c.b16 %v943, %v942
        %v956 = vpack.c.b16 %v945, %v944
        %v957 = vpack.c.b16 %v947, %v946
        %v958 = vpack.c.b16 %v949, %v948
        %v959 = vpack.c.b16 %v951, %v950
        %968 = vmatpush.bf16.msra.mxu0 %v959
        %969 = vmatpush.bf16.msra.mxu0 %v958
        %970 = vmatpush.bf16.msra.mxu0 %v957
        %971 = vmatpush.bf16.msra.mxu0 %v956
        %972 = vmatpush.bf16.msra.mxu0 %v955
        %973 = vmatpush.bf16.msra.mxu0 %v954
        %974 = vmatpush.bf16.msra.mxu0 %v953
        %975 = vmatpush.bf16.msra.mxu0 %v952
        %976 = vmatmul.bf16.gmra.mxu0 %v919
        %v977 = vpop.f32.mrf.mxu0
        %v978 = vadd.f32 0.0, %v977
        %v979 = vpop.f32.mrf.mxu0
        %980 = vdwg.mxu0
        %v981 = vadd.f32 %v688, %v978
        %v982 = vpack.c.bf16 %v981, %v981
        %v1015 = vunpack.c.l.b16 %v592
        %v1016 = vunpack.c.h.b16 %v592
        %v1017 = vunpack.c.l.b16 %v593
        %v1018 = vunpack.c.h.b16 %v593
        %v1019 = vunpack.c.l.b16 %v594
        %v1020 = vunpack.c.h.b16 %v594
        %v1021 = vunpack.c.l.b16 %v595
        %v1022 = vunpack.c.h.b16 %v595
        %v1023 = vunpack.c.l.b16 %v596
        %v1024 = vunpack.c.h.b16 %v596
        %v1025 = vunpack.c.l.b16 %v597
        %v1026 = vunpack.c.h.b16 %v597
        %v1027 = vunpack.c.l.b16 %v598
        %v1028 = vunpack.c.h.b16 %v598
        %v1029 = vunpack.c.l.b16 %v599
        %v1030 = vunpack.c.h.b16 %v599
        %v1031 = vunpack.c.l.b16 %v600
        %v1032 = vunpack.c.h.b16 %v600
        %v1033 = vunpack.c.l.b16 %v601
        %v1034 = vunpack.c.h.b16 %v601
        %v1035 = vunpack.c.l.b16 %v602
        %v1036 = vunpack.c.h.b16 %v602
        %v1037 = vunpack.c.l.b16 %v603
        %v1038 = vunpack.c.h.b16 %v603
        %v1039 = vunpack.c.l.b16 %v604
        %v1040 = vunpack.c.h.b16 %v604
        %v1041 = vunpack.c.l.b16 %v605
        %v1042 = vunpack.c.h.b16 %v605
        %v1043 = vunpack.c.l.b16 %v606
        %v1044 = vunpack.c.h.b16 %v606
        %v1045 = vunpack.c.l.b16 %v607
        %v1046 = vunpack.c.h.b16 %v607
        %v1047 = vunpack.c.l.b16 %v608
        %v1048 = vunpack.c.h.b16 %v608
        %v1049 = vunpack.c.l.b16 %v609
        %v1050 = vunpack.c.h.b16 %v609
        %v1051 = vunpack.c.l.b16 %v610
        %v1052 = vunpack.c.h.b16 %v610
        %v1053 = vunpack.c.l.b16 %v611
        %v1054 = vunpack.c.h.b16 %v611
        %v1055 = vunpack.c.l.b16 %v612
        %v1056 = vunpack.c.h.b16 %v612
        %v1057 = vunpack.c.l.b16 %v613
        %v1058 = vunpack.c.h.b16 %v613
        %v1059 = vunpack.c.l.b16 %v614
        %v1060 = vunpack.c.h.b16 %v614
        %v1061 = vunpack.c.l.b16 %v615
        %v1062 = vunpack.c.h.b16 %v615
        %v1063 = vunpack.c.l.b16 %v616
        %v1064 = vunpack.c.h.b16 %v616
        %v1065 = vunpack.c.l.b16 %v617
        %v1066 = vunpack.c.h.b16 %v617
        %v1067 = vunpack.c.l.b16 %v618
        %v1068 = vunpack.c.h.b16 %v618
        %v1069 = vunpack.c.l.b16 %v619
        %v1070 = vunpack.c.h.b16 %v619
        %v1071 = vunpack.c.l.b16 %v620
        %v1072 = vunpack.c.h.b16 %v620
        %v1073 = vunpack.c.l.b16 %v621
        %v1074 = vunpack.c.h.b16 %v621
        %v1075 = vunpack.c.l.b16 %v622
        %v1076 = vunpack.c.h.b16 %v622
        %v1077 = vunpack.c.l.b16 %v623
        %v1078 = vunpack.c.h.b16 %v623
        %v1079 = vpack.c.b16 %v1019, %v1015
        %v1080 = vpack.c.b16 %v1020, %v1016
        %v1081 = vpack.c.b16 %v1021, %v1017
        %v1082 = vpack.c.b16 %v1022, %v1018
        %v1083 = vpack.c.b16 %v1027, %v1023
        %v1084 = vpack.c.b16 %v1028, %v1024
        %v1085 = vpack.c.b16 %v1029, %v1025
        %v1086 = vpack.c.b16 %v1030, %v1026
        %v1087 = vpack.c.b16 %v1035, %v1031
        %v1088 = vpack.c.b16 %v1036, %v1032
        %v1089 = vpack.c.b16 %v1037, %v1033
        %v1090 = vpack.c.b16 %v1038, %v1034
        %v1091 = vpack.c.b16 %v1043, %v1039
        %v1092 = vpack.c.b16 %v1044, %v1040
        %v1093 = vpack.c.b16 %v1045, %v1041
        %v1094 = vpack.c.b16 %v1046, %v1042
        %v1095 = vpack.c.b16 %v1051, %v1047
        %v1096 = vpack.c.b16 %v1052, %v1048
        %v1097 = vpack.c.b16 %v1053, %v1049
        %v1098 = vpack.c.b16 %v1054, %v1050
        %v1099 = vpack.c.b16 %v1059, %v1055
        %v1100 = vpack.c.b16 %v1060, %v1056
        %v1101 = vpack.c.b16 %v1061, %v1057
        %v1102 = vpack.c.b16 %v1062, %v1058
        %v1103 = vpack.c.b16 %v1067, %v1063
        %v1104 = vpack.c.b16 %v1068, %v1064
        %v1105 = vpack.c.b16 %v1069, %v1065
        %v1106 = vpack.c.b16 %v1070, %v1066
        %v1107 = vpack.c.b16 %v1075, %v1071
        %v1108 = vpack.c.b16 %v1076, %v1072
        %v1109 = vpack.c.b16 %v1077, %v1073
        %v1110 = vpack.c.b16 %v1078, %v1074
        %1143 = vmatpush.bf16.msra.mxu0 %v1107
        %1144 = vmatpush.bf16.msra.mxu0 %v1103
        %1145 = vmatpush.bf16.msra.mxu0 %v1099
        %1146 = vmatpush.bf16.msra.mxu0 %v1095
        %1147 = vmatpush.bf16.msra.mxu0 %v1091
        %1148 = vmatpush.bf16.msra.mxu0 %v1087
        %1149 = vmatpush.bf16.msra.mxu0 %v1083
        %1150 = vmatpush.bf16.msra.mxu0 %v1079
        %1151 = vmatmul.bf16.gmra.mxu0 %v982
        %v1152 = vpop.f32.mrf.mxu0
        %v1153 = vadd.f32 0.0, %v1152
        %v1154 = vpop.f32.mrf.mxu0
        %1155 = vdwg.mxu0
        %1156 = vmatpush.bf16.msra.mxu0 %v1108
        %1157 = vmatpush.bf16.msra.mxu0 %v1104
        %1158 = vmatpush.bf16.msra.mxu0 %v1100
        %1159 = vmatpush.bf16.msra.mxu0 %v1096
        %1160 = vmatpush.bf16.msra.mxu0 %v1092
        %1161 = vmatpush.bf16.msra.mxu0 %v1088
        %1162 = vmatpush.bf16.msra.mxu0 %v1084
        %1163 = vmatpush.bf16.msra.mxu0 %v1080
        %1164 = vmatmul.bf16.gmra.mxu0 %v982
        %v1165 = vpop.f32.mrf.mxu0
        %v1166 = vadd.f32 0.0, %v1165
        %v1167 = vpop.f32.mrf.mxu0
        %1168 = vdwg.mxu0
        %1169 = vmatpush.bf16.msra.mxu0 %v1109
        %1170 = vmatpush.bf16.msra.mxu0 %v1105
        %1171 = vmatpush.bf16.msra.mxu0 %v1101
        %1172 = vmatpush.bf16.msra.mxu0 %v1097
        %1173 = vmatpush.bf16.msra.mxu0 %v1093
        %1174 = vmatpush.bf16.msra.mxu0 %v1089
        %1175 = vmatpush.bf16.msra.mxu0 %v1085
        %1176 = vmatpush.bf16.msra.mxu0 %v1081
        %1177 = vmatmul.bf16.gmra.mxu0 %v982
        %v1178 = vpop.f32.mrf.mxu0
        %v1179 = vadd.f32 0.0, %v1178
        %v1180 = vpop.f32.mrf.mxu0
        %1181 = vdwg.mxu0
        %1182 = vmatpush.bf16.msra.mxu0 %v1110
        %1183 = vmatpush.bf16.msra.mxu0 %v1106
        %1184 = vmatpush.bf16.msra.mxu0 %v1102
        %1185 = vmatpush.bf16.msra.mxu0 %v1098
        %1186 = vmatpush.bf16.msra.mxu0 %v1094
        %1187 = vmatpush.bf16.msra.mxu0 %v1090
        %1188 = vmatpush.bf16.msra.mxu0 %v1086
        %1189 = vmatpush.bf16.msra.mxu0 %v1082
        %1190 = vmatmul.bf16.gmra.mxu0 %v982
        %v1191 = vpop.f32.mrf.mxu0
        %v1192 = vadd.f32 0.0, %v1191
        %v1193 = vpop.f32.mrf.mxu0
        %1194 = vdwg.mxu0
        %v1195 = vmul.f32 %v1153, 0.5
        %v1196 = vmul.f32 %v1166, 0.5
        %v1197 = vmul.f32 %v1179, 0.5
        %v1198 = vmul.f32 %v1192, 0.5
        %v1199 = vmul.f32 %v1153, 0.044715
        %v1200 = vmul.f32 %v1166, 0.044715
        %v1201 = vmul.f32 %v1179, 0.044715
        %v1202 = vmul.f32 %v1192, 0.044715
        %v1203 = vmul.f32 %v1199, %v1153
        %v1204 = vmul.f32 %v1200, %v1166
        %v1205 = vmul.f32 %v1201, %v1179
        %v1206 = vmul.f32 %v1202, %v1192
        %v1207 = vmul.f32 %v1203, %v1153
        %v1208 = vmul.f32 %v1204, %v1166
        %v1209 = vmul.f32 %v1205, %v1179
        %v1210 = vmul.f32 %v1206, %v1192
        %v1211 = vadd.f32 %v1153, %v1207
        %v1212 = vadd.f32 %v1166, %v1208
        %v1213 = vadd.f32 %v1179, %v1209
        %v1214 = vadd.f32 %v1192, %v1210
        %v1215 = vmul.f32 %v1211, 0.7978846
        %v1216 = vmul.f32 %v1212, 0.7978846
        %v1217 = vmul.f32 %v1213, 0.7978846
        %v1218 = vmul.f32 %v1214, 0.7978846
        %v1219 = vtanh.pop %v1215
        %v1220 = vtanh.pop %v1216
        %v1221 = vtanh.pop %v1217
        %v1222 = vtanh.pop %v1218
        %v1223 = vadd.f32 %v1219, 1.0
        %v1224 = vadd.f32 %v1220, 1.0
        %v1225 = vadd.f32 %v1221, 1.0
        %v1226 = vadd.f32 %v1222, 1.0
        %v1227 = vmul.f32 %v1195, %v1223
        %v1228 = vmul.f32 %v1196, %v1224
        %v1229 = vmul.f32 %v1197, %v1225
        %v1230 = vmul.f32 %v1198, %v1226
        %v1231 = vpack.c.bf16 %v1227, %v1227
        %v1232 = vpack.c.bf16 %v1228, %v1228
        %v1233 = vpack.c.bf16 %v1229, %v1229
        %v1234 = vpack.c.bf16 %v1230, %v1230
        %v1299 = vunpack.c.l.b16 %v624
        %v1300 = vunpack.c.l.b16 %v625
        %v1301 = vunpack.c.l.b16 %v626
        %v1302 = vunpack.c.l.b16 %v627
        %v1303 = vunpack.c.l.b16 %v628
        %v1304 = vunpack.c.l.b16 %v629
        %v1305 = vunpack.c.l.b16 %v630
        %v1306 = vunpack.c.l.b16 %v631
        %v1307 = vunpack.c.l.b16 %v632
        %v1308 = vunpack.c.l.b16 %v633
        %v1309 = vunpack.c.l.b16 %v634
        %v1310 = vunpack.c.l.b16 %v635
        %v1311 = vunpack.c.l.b16 %v636
        %v1312 = vunpack.c.l.b16 %v637
        %v1313 = vunpack.c.l.b16 %v638
        %v1314 = vunpack.c.l.b16 %v639
        %v1315 = vunpack.c.l.b16 %v640
        %v1316 = vunpack.c.l.b16 %v641
        %v1317 = vunpack.c.l.b16 %v642
        %v1318 = vunpack.c.l.b16 %v643
        %v1319 = vunpack.c.l.b16 %v644
        %v1320 = vunpack.c.l.b16 %v645
        %v1321 = vunpack.c.l.b16 %v646
        %v1322 = vunpack.c.l.b16 %v647
        %v1323 = vunpack.c.l.b16 %v648
        %v1324 = vunpack.c.l.b16 %v649
        %v1325 = vunpack.c.l.b16 %v650
        %v1326 = vunpack.c.l.b16 %v651
        %v1327 = vunpack.c.l.b16 %v652
        %v1328 = vunpack.c.l.b16 %v653
        %v1329 = vunpack.c.l.b16 %v654
        %v1330 = vunpack.c.l.b16 %v655
        %v1331 = vunpack.c.l.b16 %v656
        %v1332 = vunpack.c.l.b16 %v657
        %v1333 = vunpack.c.l.b16 %v658
        %v1334 = vunpack.c.l.b16 %v659
        %v1335 = vunpack.c.l.b16 %v660
        %v1336 = vunpack.c.l.b16 %v661
        %v1337 = vunpack.c.l.b16 %v662
        %v1338 = vunpack.c.l.b16 %v663
        %v1339 = vunpack.c.l.b16 %v664
        %v1340 = vunpack.c.l.b16 %v665
        %v1341 = vunpack.c.l.b16 %v666
        %v1342 = vunpack.c.l.b16 %v667
        %v1343 = vunpack.c.l.b16 %v668
        %v1344 = vunpack.c.l.b16 %v669
        %v1345 = vunpack.c.l.b16 %v670
        %v1346 = vunpack.c.l.b16 %v671
        %v1347 = vunpack.c.l.b16 %v672
        %v1348 = vunpack.c.l.b16 %v673
        %v1349 = vunpack.c.l.b16 %v674
        %v1350 = vunpack.c.l.b16 %v675
        %v1351 = vunpack.c.l.b16 %v676
        %v1352 = vunpack.c.l.b16 %v677
        %v1353 = vunpack.c.l.b16 %v678
        %v1354 = vunpack.c.l.b16 %v679
        %v1355 = vunpack.c.l.b16 %v680
        %v1356 = vunpack.c.l.b16 %v681
        %v1357 = vunpack.c.l.b16 %v682
        %v1358 = vunpack.c.l.b16 %v683
        %v1359 = vunpack.c.l.b16 %v684
        %v1360 = vunpack.c.l.b16 %v685
        %v1361 = vunpack.c.l.b16 %v686
        %v1362 = vunpack.c.l.b16 %v687
        %v1363 = vpack.c.b16 %v1300, %v1299
        %v1364 = vpack.c.b16 %v1302, %v1301
        %v1365 = vpack.c.b16 %v1304, %v1303
        %v1366 = vpack.c.b16 %v1306, %v1305
        %v1367 = vpack.c.b16 %v1308, %v1307
        %v1368 = vpack.c.b16 %v1310, %v1309
        %v1369 = vpack.c.b16 %v1312, %v1311
        %v1370 = vpack.c.b16 %v1314, %v1313
        %v1371 = vpack.c.b16 %v1316, %v1315
        %v1372 = vpack.c.b16 %v1318, %v1317
        %v1373 = vpack.c.b16 %v1320, %v1319
        %v1374 = vpack.c.b16 %v1322, %v1321
        %v1375 = vpack.c.b16 %v1324, %v1323
        %v1376 = vpack.c.b16 %v1326, %v1325
        %v1377 = vpack.c.b16 %v1328, %v1327
        %v1378 = vpack.c.b16 %v1330, %v1329
        %v1379 = vpack.c.b16 %v1332, %v1331
        %v1380 = vpack.c.b16 %v1334, %v1333
        %v1381 = vpack.c.b16 %v1336, %v1335
        %v1382 = vpack.c.b16 %v1338, %v1337
        %v1383 = vpack.c.b16 %v1340, %v1339
        %v1384 = vpack.c.b16 %v1342, %v1341
        %v1385 = vpack.c.b16 %v1344, %v1343
        %v1386 = vpack.c.b16 %v1346, %v1345
        %v1387 = vpack.c.b16 %v1348, %v1347
        %v1388 = vpack.c.b16 %v1350, %v1349
        %v1389 = vpack.c.b16 %v1352, %v1351
        %v1390 = vpack.c.b16 %v1354, %v1353
        %v1391 = vpack.c.b16 %v1356, %v1355
        %v1392 = vpack.c.b16 %v1358, %v1357
        %v1393 = vpack.c.b16 %v1360, %v1359
        %v1394 = vpack.c.b16 %v1362, %v1361
        %1427 = vmatpush.bf16.msra.mxu0 %v1370
        %1428 = vmatpush.bf16.msra.mxu0 %v1369
        %1429 = vmatpush.bf16.msra.mxu0 %v1368
        %1430 = vmatpush.bf16.msra.mxu0 %v1367
        %1431 = vmatpush.bf16.msra.mxu0 %v1366
        %1432 = vmatpush.bf16.msra.mxu0 %v1365
        %1433 = vmatpush.bf16.msra.mxu0 %v1364
        %1434 = vmatpush.bf16.msra.mxu0 %v1363
        %1435 = vmatmul.bf16.gmra.mxu0 %v1231
        %v1436 = vpop.f32.mrf.mxu0
        %v1437 = vadd.f32 0.0, %v1436
        %v1438 = vpop.f32.mrf.mxu0
        %1439 = vdwg.mxu0
        %1440 = vmatpush.bf16.msra.mxu0 %v1378
        %1441 = vmatpush.bf16.msra.mxu0 %v1377
        %1442 = vmatpush.bf16.msra.mxu0 %v1376
        %1443 = vmatpush.bf16.msra.mxu0 %v1375
        %1444 = vmatpush.bf16.msra.mxu0 %v1374
        %1445 = vmatpush.bf16.msra.mxu0 %v1373
        %1446 = vmatpush.bf16.msra.mxu0 %v1372
        %1447 = vmatpush.bf16.msra.mxu0 %v1371
        %1448 = vmatmul.bf16.gmra.mxu0 %v1232
        %v1449 = vpop.f32.mrf.mxu0
        %v1450 = vadd.f32 %v1437, %v1449
        %v1451 = vpop.f32.mrf.mxu0
        %1452 = vdwg.mxu0
        %1453 = vmatpush.bf16.msra.mxu0 %v1386
        %1454 = vmatpush.bf16.msra.mxu0 %v1385
        %1455 = vmatpush.bf16.msra.mxu0 %v1384
        %1456 = vmatpush.bf16.msra.mxu0 %v1383
        %1457 = vmatpush.bf16.msra.mxu0 %v1382
        %1458 = vmatpush.bf16.msra.mxu0 %v1381
        %1459 = vmatpush.bf16.msra.mxu0 %v1380
        %1460 = vmatpush.bf16.msra.mxu0 %v1379
        %1461 = vmatmul.bf16.gmra.mxu0 %v1233
        %v1462 = vpop.f32.mrf.mxu0
        %v1463 = vadd.f32 %v1450, %v1462
        %v1464 = vpop.f32.mrf.mxu0
        %1465 = vdwg.mxu0
        %1466 = vmatpush.bf16.msra.mxu0 %v1394
        %1467 = vmatpush.bf16.msra.mxu0 %v1393
        %1468 = vmatpush.bf16.msra.mxu0 %v1392
        %1469 = vmatpush.bf16.msra.mxu0 %v1391
        %1470 = vmatpush.bf16.msra.mxu0 %v1390
        %1471 = vmatpush.bf16.msra.mxu0 %v1389
        %1472 = vmatpush.bf16.msra.mxu0 %v1388
        %1473 = vmatpush.bf16.msra.mxu0 %v1387
        %1474 = vmatmul.bf16.gmra.mxu0 %v1234
        %v1475 = vpop.f32.mrf.mxu0
        %v1476 = vadd.f32 %v1463, %v1475
        %v1477 = vpop.f32.mrf.mxu0
        %1478 = vdwg.mxu0
        %v1479 = vadd.f32 %v981, %v1476
        %v1480 = vld [vmem:[#allocation6] sm:$0xff]
        %v1481 = vld [vmem:[#allocation6 + $0x8] sm:$0xf]
        %v1482 = vld [vmem:[#allocation6 + $0xc] sm:$0xff]
        %v1483 = vld [vmem:[#allocation6 + $0x14] sm:$0xf]
        %v1484 = vld [vmem:[#allocation6 + $0x18] sm:$0xff]
        %v1485 = vld [vmem:[#allocation6 + $0x20] sm:$0xf]
        %v1486 = vld [vmem:[#allocation6 + $0x24] sm:$0xff]
        %v1487 = vld [vmem:[#allocation6 + $0x2c] sm:$0xf]
        %v1488 = vld [vmem:[#allocation6 + $0x30] sm:$0xff]
        %v1489 = vld [vmem:[#allocation6 + $0x38] sm:$0xf]
        %v1490 = vld [vmem:[#allocation6 + $0x3c] sm:$0xff]
        %v1491 = vld [vmem:[#allocation6 + $0x44] sm:$0xf]
        %v1492 = vld [vmem:[#allocation6 + $0x48] sm:$0xff]
        %v1493 = vld [vmem:[#allocation6 + $0x50] sm:$0xf]
        %v1494 = vld [vmem:[#allocation6 + $0x54] sm:$0xff]
        %v1495 = vld [vmem:[#allocation6 + $0x5c] sm:$0xf]
        %v1496 = vld [vmem:[#allocation6 + $0x60] sm:$0xff]
        %v1497 = vld [vmem:[#allocation6 + $0x68] sm:$0xf]
        %v1498 = vld [vmem:[#allocation6 + $0x6c] sm:$0xff]
        %v1499 = vld [vmem:[#allocation6 + $0x74] sm:$0xf]
        %v1500 = vld [vmem:[#allocation6 + $0x78] sm:$0xff]
        %v1501 = vld [vmem:[#allocation6 + $0x80] sm:$0xf]
        %v1502 = vld [vmem:[#allocation6 + $0x84] sm:$0xff]
        %v1503 = vld [vmem:[#allocation6 + $0x8c] sm:$0xf]
        %v1504 = vld [vmem:[#allocation6 + $0x90] sm:$0xff]
        %v1505 = vld [vmem:[#allocation6 + $0x98] sm:$0xf]
        %v1506 = vld [vmem:[#allocation6 + $0x9c] sm:$0xff]
        %v1507 = vld [vmem:[#allocation6 + $0xa4] sm:$0xf]
        %v1508 = vld [vmem:[#allocation6 + $0xa8] sm:$0xff]
        %v1509 = vld [vmem:[#allocation6 + $0xb0] sm:$0xf]
        %v1510 = vld [vmem:[#allocation6 + $0xb4] sm:$0xff]
        %v1511 = vld [vmem:[#allocation6 + $0xbc] sm:$0xf]
        %v1512 = vld [vmem:[#allocation8] sm:$0xf]
        %v1513 = vld [vmem:[#allocation8 + $0x4] sm:$0xf]
        %v1514 = vld [vmem:[#allocation8 + $0x8] sm:$0xf]
        %v1515 = vld [vmem:[#allocation8 + $0xc] sm:$0xf]
        %v1516 = vld [vmem:[#allocation8 + $0x10] sm:$0xf]
        %v1517 = vld [vmem:[#allocation8 + $0x14] sm:$0xf]
        %v1518 = vld [vmem:[#allocation8 + $0x18] sm:$0xf]
        %v1519 = vld [vmem:[#allocation8 + $0x1c] sm:$0xf]
        %v1520 = vld [vmem:[#allocation8 + $0x20] sm:$0xf]
        %v1521 = vld [vmem:[#allocation8 + $0x24] sm:$0xf]
        %v1522 = vld [vmem:[#allocation8 + $0x28] sm:$0xf]
        %v1523 = vld [vmem:[#allocation8 + $0x2c] sm:$0xf]
        %v1524 = vld [vmem:[#allocation8 + $0x30] sm:$0xf]
        %v1525 = vld [vmem:[#allocation8 + $0x34] sm:$0xf]
        %v1526 = vld [vmem:[#allocation8 + $0x38] sm:$0xf]
        %v1527 = vld [vmem:[#allocation8 + $0x3c] sm:$0xf]
        %v1528 = vpack.c.bf16 %v1479, %v1479
        %v1530 = vshrl.u32 %v1528, 16
        %v1532 = vrot.slane %v1530, 2
        %v1566 = vunpack.c.l.b16 %v1480
        %v1567 = vunpack.c.h.b16 %v1480
        %v1568 = vunpack.c.l.b16 %v1481
        %v1569 = vunpack.c.l.b16 %v1482
        %v1570 = vunpack.c.h.b16 %v1482
        %v1571 = vunpack.c.l.b16 %v1483
        %v1572 = vunpack.c.l.b16 %v1484
        %v1573 = vunpack.c.h.b16 %v1484
        %v1574 = vunpack.c.l.b16 %v1485
        %v1575 = vunpack.c.l.b16 %v1486
        %v1576 = vunpack.c.h.b16 %v1486
        %v1577 = vunpack.c.l.b16 %v1487
        %v1578 = vunpack.c.l.b16 %v1488
        %v1579 = vunpack.c.h.b16 %v1488
        %v1580 = vunpack.c.l.b16 %v1489
        %v1581 = vunpack.c.l.b16 %v1490
        %v1582 = vunpack.c.h.b16 %v1490
        %v1583 = vunpack.c.l.b16 %v1491
        %v1584 = vunpack.c.l.b16 %v1492
        %v1585 = vunpack.c.h.b16 %v1492
        %v1586 = vunpack.c.l.b16 %v1493
        %v1587 = vunpack.c.l.b16 %v1494
        %v1588 = vunpack.c.h.b16 %v1494
        %v1589 = vunpack.c.l.b16 %v1495
        %v1590 = vunpack.c.l.b16 %v1496
        %v1591 = vunpack.c.h.b16 %v1496
        %v1592 = vunpack.c.l.b16 %v1497
        %v1593 = vunpack.c.l.b16 %v1498
        %v1594 = vunpack.c.h.b16 %v1498
        %v1595 = vunpack.c.l.b16 %v1499
        %v1596 = vunpack.c.l.b16 %v1500
        %v1597 = vunpack.c.h.b16 %v1500
        %v1598 = vunpack.c.l.b16 %v1501
        %v1599 = vunpack.c.l.b16 %v1502
        %v1600 = vunpack.c.h.b16 %v1502
        %v1601 = vunpack.c.l.b16 %v1503
        %v1602 = vunpack.c.l.b16 %v1504
        %v1603 = vunpack.c.h.b16 %v1504
        %v1604 = vunpack.c.l.b16 %v1505
        %v1605 = vunpack.c.l.b16 %v1506
        %v1606 = vunpack.c.h.b16 %v1506
        %v1607 = vunpack.c.l.b16 %v1507
        %v1608 = vunpack.c.l.b16 %v1508
        %v1609 = vunpack.c.h.b16 %v1508
        %v1610 = vunpack.c.l.b16 %v1509
        %v1611 = vunpack.c.l.b16 %v1510
        %v1612 = vunpack.c.h.b16 %v1510
        %v1613 = vunpack.c.l.b16 %v1511
        %v1614 = vpack.c.b16 %v1569, %v1566
        %v1615 = vpack.c.b16 %v1570, %v1567
        %v1616 = vpack.c.b16 %v1571, %v1568
        %v1617 = vpack.c.b16 %v1575, %v1572
        %v1618 = vpack.c.b16 %v1576, %v1573
        %v1619 = vpack.c.b16 %v1577, %v1574
        %v1620 = vpack.c.b16 %v1581, %v1578
        %v1621 = vpack.c.b16 %v1582, %v1579
        %v1622 = vpack.c.b16 %v1583, %v1580
        %v1623 = vpack.c.b16 %v1587, %v1584
        %v1624 = vpack.c.b16 %v1588, %v1585
        %v1625 = vpack.c.b16 %v1589, %v1586
        %v1626 = vpack.c.b16 %v1593, %v1590
        %v1627 = vpack.c.b16 %v1594, %v1591
        %v1628 = vpack.c.b16 %v1595, %v1592
        %v1629 = vpack.c.b16 %v1599, %v1596
        %v1630 = vpack.c.b16 %v1600, %v1597
        %v1631 = vpack.c.b16 %v1601, %v1598
        %v1632 = vpack.c.b16 %v1605, %v1602
        %v1633 = vpack.c.b16 %v1606, %v1603
        %v1634 = vpack.c.b16 %v1607, %v1604
        %v1635 = vpack.c.b16 %v1611, %v1608
        %v1636 = vpack.c.b16 %v1612, %v1609
        %v1637 = vpack.c.b16 %v1613, %v1610
        %1662 = vmatpush.bf16.msra.mxu0 %v1635
        %1663 = vmatpush.bf16.msra.mxu0 %v1632
        %1664 = vmatpush.bf16.msra.mxu0 %v1629
        %1665 = vmatpush.bf16.msra.mxu0 %v1626
        %1666 = vmatpush.bf16.msra.mxu0 %v1623
        %1667 = vmatpush.bf16.msra.mxu0 %v1620
        %1668 = vmatpush.bf16.msra.mxu0 %v1617
        %1669 = vmatpush.bf16.msra.mxu0 %v1614
        %1670 = vmatmul.bf16.gmra.mxu0 %v1532
        %v1671 = vpop.f32.mrf.mxu0
        %v1672 = vadd.f32 0.0, %v1671
        %v1673 = vpop.f32.mrf.mxu0
        %1674 = vdwg.mxu0
        %1675 = vmatpush.bf16.msra.mxu0 %v1636
        %1676 = vmatpush.bf16.msra.mxu0 %v1633
        %1677 = vmatpush.bf16.msra.mxu0 %v1630
        %1678 = vmatpush.bf16.msra.mxu0 %v1627
        %1679 = vmatpush.bf16.msra.mxu0 %v1624
        %1680 = vmatpush.bf16.msra.mxu0 %v1621
        %1681 = vmatpush.bf16.msra.mxu0 %v1618
        %1682 = vmatpush.bf16.msra.mxu0 %v1615
        %1683 = vmatmul.bf16.gmra.mxu0 %v1532
        %v1684 = vpop.f32.mrf.mxu0
        %v1685 = vadd.f32 0.0, %v1684
        %v1686 = vpop.f32.mrf.mxu0
        %1687 = vdwg.mxu0
        %1688 = vmatpush.bf16.msra.mxu0 %v1637
        %1689 = vmatpush.bf16.msra.mxu0 %v1634
        %1690 = vmatpush.bf16.msra.mxu0 %v1631
        %1691 = vmatpush.bf16.msra.mxu0 %v1628
        %1692 = vmatpush.bf16.msra.mxu0 %v1625
        %1693 = vmatpush.bf16.msra.mxu0 %v1622
        %1694 = vmatpush.bf16.msra.mxu0 %v1619
        %1695 = vmatpush.bf16.msra.mxu0 %v1616
        %1696 = vmatmul.bf16.gmra.mxu0 %v1532
        %v1697 = vpop.f32.mrf.mxu0
        %v1698 = vadd.f32 0.0, %v1697
        %v1699 = vpop.f32.mrf.mxu0
        %1700 = vdwg.mxu0
        %v1701 = vpack.c.bf16 %v1685, %v1685
        %v1703 = vrot.slane %v1701, 5
        %vm1705 = vcmask 1043459
        %vm1706 = vsmask.f32 3328
        %vm1707 = vmand %vm1705, %vm1706
        %v1708 = vld [vmem:[#allocation2] sm:$0x8]
        %v1709 = vsel %vm1707, %v1703, %v1708
        %1710 = vst [vmem:[#allocation2] sm:$0x8] %v1709
        %v1711 = vpack.c.bf16 %v1698, %v1698
        %v1713 = vrot.slane %v1711, 5
        %v1715 = vld [vmem:[#allocation3] sm:$0x8]
        %v1716 = vsel %vm1707, %v1713, %v1715
        %1717 = vst [vmem:[#allocation3] sm:$0x8] %v1716
        %v1718 = vld [vmem:[#allocation2] sm:$0xf]
        %v1719 = vld [vmem:[#allocation3] sm:$0xf]
        %v1720 = vpack.c.bf16 %v1672, %v1672
        %1721 = vmatpush.bf16.xpose.msra.mxu0 0
        %1722 = vmatpush.bf16.xpose.msra.mxu0 0
        %1723 = vmatpush.bf16.xpose.msra.mxu0 0
        %1724 = vmatpush.bf16.xpose.msra.mxu0 0
        %1725 = vmatpush.bf16.xpose.msra.mxu0 0
        %1726 = vmatpush.bf16.xpose.msra.mxu0 0
        %1727 = vmatpush.bf16.xpose.msra.mxu0 0
        %1728 = vmatpush.bf16.xpose.msra.mxu0 %v1718
        %1729 = vmatmul.bf16.gmra.mxu0 %v1720
        %v1730 = vpop.f32.mrf.mxu0
        %v1731 = vadd.f32 0.0, %v1730
        %v1732 = vpop.f32.mrf.mxu0
        %1733 = vdwg.mxu0
        %v1734 = vadd.s32 %v878, 6
        %vm1735 = vcmp.le.s32.totalorder %v880, %v1734
        %vm1736 = vcmp.lt.s32.totalorder %v880, 7
        %vm1737 = vmand %vm1735, %vm1736
        %v1738 = vsel %vm1737, %v1731, -1e+30
        %vm1739 = vcmask 57344
        %v1740 = vsel %vm1739, %v1738, -inf
        %1741 = vmax.xlane.f32.xlu0 %v1740
        %v1742 = vpop.xlane.xlu0 %1741
        %v1743 = vsub.f32 %v1738, %v1742
        %v1744 = vmul.f32 %v1743, 1.442695
        %v1745 = vpow.pop %v1744
        %v1746 = vsel %vm1739, %v1745, 0.0
        %1747 = vadd.xlane.f32.xlu0 %v1746
        %v1748 = vpop.xlane.xlu0 %1747
        %v1749 = vrcp.pop %v1748
        %v1750 = vmul.f32 %v1745, %v1749
        %v1751 = vpack.c.bf16 %v1750, %v1750
        %v1753 = vsel %vm898, %v1751, 0
        %v1756 = vsel %vm902, %v1719, 0
        %1758 = vmatpush.bf16.msra.mxu0 0
        %1759 = vmatpush.bf16.msra.mxu0 0
        %1760 = vmatpush.bf16.msra.mxu0 0
        %1761 = vmatpush.bf16.msra.mxu0 0
        %1762 = vmatpush.bf16.msra.mxu0 0
        %1763 = vmatpush.bf16.msra.mxu0 0
        %1764 = vmatpush.bf16.msra.mxu0 0
        %1765 = vmatpush.bf16.msra.mxu0 %v1756
        %1766 = vmatmul.bf16.gmra.mxu0 %v1753
        %v1767 = vpop.f32.mrf.mxu0
        %v1768 = vadd.f32 0.0, %v1767
        %v1769 = vpop.f32.mrf.mxu0
        %1770 = vdwg.mxu0
        %v1771 = vpack.c.bf16 %v1768, %v1768
        %1772 = vmatpush.bf16.msra.mxu0 %v959
        %1773 = vmatpush.bf16.msra.mxu0 %v958
        %1774 = vmatpush.bf16.msra.mxu0 %v957
        %1775 = vmatpush.bf16.msra.mxu0 %v956
        %1776 = vmatpush.bf16.msra.mxu0 %v955
        %1777 = vmatpush.bf16.msra.mxu0 %v954
        %1778 = vmatpush.bf16.msra.mxu0 %v953
        %1779 = vmatpush.bf16.msra.mxu0 %v952
        %1780 = vmatmul.bf16.gmra.mxu0 %v1771
        %v1781 = vpop.f32.mrf.mxu0
        %v1782 = vadd.f32 0.0, %v1781
        %v1783 = vpop.f32.mrf.mxu0
        %1784 = vdwg.mxu0
        %v1801 = vunpack.c.l.b16 %v1512
        %v1802 = vunpack.c.l.b16 %v1513
        %v1803 = vunpack.c.l.b16 %v1514
        %v1804 = vunpack.c.l.b16 %v1515
        %v1805 = vunpack.c.l.b16 %v1516
        %v1806 = vunpack.c.l.b16 %v1517
        %v1807 = vunpack.c.l.b16 %v1518
        %v1808 = vunpack.c.l.b16 %v1519
        %v1809 = vunpack.c.l.b16 %v1520
        %v1810 = vunpack.c.l.b16 %v1521
        %v1811 = vunpack.c.l.b16 %v1522
        %v1812 = vunpack.c.l.b16 %v1523
        %v1813 = vunpack.c.l.b16 %v1524
        %v1814 = vunpack.c.l.b16 %v1525
        %v1815 = vunpack.c.l.b16 %v1526
        %v1816 = vunpack.c.l.b16 %v1527
        %v1817 = vpack.c.b16 %v1802, %v1801
        %v1818 = vpack.c.b16 %v1804, %v1803
        %v1819 = vpack.c.b16 %v1806, %v1805
        %v1820 = vpack.c.b16 %v1808, %v1807
        %v1821 = vpack.c.b16 %v1810, %v1809
        %v1822 = vpack.c.b16 %v1812, %v1811
        %v1823 = vpack.c.b16 %v1814, %v1813
        %v1824 = vpack.c.b16 %v1816, %v1815
        %1833 = vmatpush.bf16.msra.mxu0 %v1824
        %1834 = vmatpush.bf16.msra.mxu0 %v1823
        %1835 = vmatpush.bf16.msra.mxu0 %v1822
        %1836 = vmatpush.bf16.msra.mxu0 %v1821
        %1837 = vmatpush.bf16.msra.mxu0 %v1820
        %1838 = vmatpush.bf16.msra.mxu0 %v1819
        %1839 = vmatpush.bf16.msra.mxu0 %v1818
        %1840 = vmatpush.bf16.msra.mxu0 %v1817
        %1841 = vmatmul.bf16.gmra.mxu0 %v1532
        %v1842 = vpop.f32.mrf.mxu0
        %v1843 = vadd.f32 %v1782, %v1842
        %v1844 = vpop.f32.mrf.mxu0
        %1845 = vdwg.mxu0
        %v1846 = vpack.c.bf16 %v1843, %v1843
        %1847 = vmatpush.bf16.msra.mxu0 %v1107
        %1848 = vmatpush.bf16.msra.mxu0 %v1103
        %1849 = vmatpush.bf16.msra.mxu0 %v1099
        %1850 = vmatpush.bf16.msra.mxu0 %v1095
        %1851 = vmatpush.bf16.msra.mxu0 %v1091
        %1852 = vmatpush.bf16.msra.mxu0 %v1087
        %1853 = vmatpush.bf16.msra.mxu0 %v1083
        %1854 = vmatpush.bf16.msra.mxu0 %v1079
        %1855 = vmatmul.bf16.gmra.mxu0 %v1846
        %v1856 = vpop.f32.mrf.mxu0
        %v1857 = vadd.f32 0.0, %v1856
        %v1858 = vpop.f32.mrf.mxu0
        %1859 = vdwg.mxu0
        %1860 = vmatpush.bf16.msra.mxu0 %v1108
        %1861 = vmatpush.bf16.msra.mxu0 %v1104
        %1862 = vmatpush.bf16.msra.mxu0 %v1100
        %1863 = vmatpush.bf16.msra.mxu0 %v1096
        %1864 = vmatpush.bf16.msra.mxu0 %v1092
        %1865 = vmatpush.bf16.msra.mxu0 %v1088
        %1866 = vmatpush.bf16.msra.mxu0 %v1084
        %1867 = vmatpush.bf16.msra.mxu0 %v1080
        %1868 = vmatmul.bf16.gmra.mxu0 %v1846
        %v1869 = vpop.f32.mrf.mxu0
        %v1870 = vadd.f32 0.0, %v1869
        %v1871 = vpop.f32.mrf.mxu0
        %1872 = vdwg.mxu0
        %1873 = vmatpush.bf16.msra.mxu0 %v1109
        %1874 = vmatpush.bf16.msra.mxu0 %v1105
        %1875 = vmatpush.bf16.msra.mxu0 %v1101
        %1876 = vmatpush.bf16.msra.mxu0 %v1097
        %1877 = vmatpush.bf16.msra.mxu0 %v1093
        %1878 = vmatpush.bf16.msra.mxu0 %v1089
        %1879 = vmatpush.bf16.msra.mxu0 %v1085
        %1880 = vmatpush.bf16.msra.mxu0 %v1081
        %1881 = vmatmul.bf16.gmra.mxu0 %v1846
        %v1882 = vpop.f32.mrf.mxu0
        %v1883 = vadd.f32 0.0, %v1882
        %v1884 = vpop.f32.mrf.mxu0
        %1885 = vdwg.mxu0
        %1886 = vmatpush.bf16.msra.mxu0 %v1110
        %1887 = vmatpush.bf16.msra.mxu0 %v1106
        %1888 = vmatpush.bf16.msra.mxu0 %v1102
        %1889 = vmatpush.bf16.msra.mxu0 %v1098
        %1890 = vmatpush.bf16.msra.mxu0 %v1094
        %1891 = vmatpush.bf16.msra.mxu0 %v1090
        %1892 = vmatpush.bf16.msra.mxu0 %v1086
        %1893 = vmatpush.bf16.msra.mxu0 %v1082
        %1894 = vmatmul.bf16.gmra.mxu0 %v1846
        %v1895 = vpop.f32.mrf.mxu0
        %v1896 = vadd.f32 0.0, %v1895
        %v1897 = vpop.f32.mrf.mxu0
        %1898 = vdwg.mxu0
        %v1899 = vmul.f32 %v1857, 0.5
        %v1900 = vmul.f32 %v1870, 0.5
        %v1901 = vmul.f32 %v1883, 0.5
        %v1902 = vmul.f32 %v1896, 0.5
        %v1903 = vmul.f32 %v1857, 0.044715
        %v1904 = vmul.f32 %v1870, 0.044715
        %v1905 = vmul.f32 %v1883, 0.044715
        %v1906 = vmul.f32 %v1896, 0.044715
        %v1907 = vmul.f32 %v1903, %v1857
        %v1908 = vmul.f32 %v1904, %v1870
        %v1909 = vmul.f32 %v1905, %v1883
        %v1910 = vmul.f32 %v1906, %v1896
        %v1911 = vmul.f32 %v1907, %v1857
        %v1912 = vmul.f32 %v1908, %v1870
        %v1913 = vmul.f32 %v1909, %v1883
        %v1914 = vmul.f32 %v1910, %v1896
        %v1915 = vadd.f32 %v1857, %v1911
        %v1916 = vadd.f32 %v1870, %v1912
        %v1917 = vadd.f32 %v1883, %v1913
        %v1918 = vadd.f32 %v1896, %v1914
        %v1919 = vmul.f32 %v1915, 0.7978846
        %v1920 = vmul.f32 %v1916, 0.7978846
        %v1921 = vmul.f32 %v1917, 0.7978846
        %v1922 = vmul.f32 %v1918, 0.7978846
        %v1923 = vtanh.pop %v1919
        %v1924 = vtanh.pop %v1920
        %v1925 = vtanh.pop %v1921
        %v1926 = vtanh.pop %v1922
        %v1927 = vadd.f32 %v1923, 1.0
        %v1928 = vadd.f32 %v1924, 1.0
        %v1929 = vadd.f32 %v1925, 1.0
        %v1930 = vadd.f32 %v1926, 1.0
        %v1931 = vmul.f32 %v1899, %v1927
        %v1932 = vmul.f32 %v1900, %v1928
        %v1933 = vmul.f32 %v1901, %v1929
        %v1934 = vmul.f32 %v1902, %v1930
        %v1935 = vpack.c.bf16 %v1931, %v1931
        %v1936 = vpack.c.bf16 %v1932, %v1932
        %v1937 = vpack.c.bf16 %v1933, %v1933
        %v1938 = vpack.c.bf16 %v1934, %v1934
        %1939 = vmatpush.bf16.msra.mxu0 %v1370
        %1940 = vmatpush.bf16.msra.mxu0 %v1369
        %1941 = vmatpush.bf16.msra.mxu0 %v1368
        %1942 = vmatpush.bf16.msra.mxu0 %v1367
        %1943 = vmatpush.bf16.msra.mxu0 %v1366
        %1944 = vmatpush.bf16.msra.mxu0 %v1365
        %1945 = vmatpush.bf16.msra.mxu0 %v1364
        %1946 = vmatpush.bf16.msra.mxu0 %v1363
        %1947 = vmatmul.bf16.gmra.mxu0 %v1935
        %v1948 = vpop.f32.mrf.mxu0
        %v1949 = vadd.f32 0.0, %v1948
        %v1950 = vpop.f32.mrf.mxu0
        %1951 = vdwg.mxu0
        %1952 = vmatpush.bf16.msra.mxu0 %v1378
        %1953 = vmatpush.bf16.msra.mxu0 %v1377
        %1954 = vmatpush.bf16.msra.mxu0 %v1376
        %1955 = vmatpush.bf16.msra.mxu0 %v1375
        %1956 = vmatpush.bf16.msra.mxu0 %v1374
        %1957 = vmatpush.bf16.msra.mxu0 %v1373
        %1958 = vmatpush.bf16.msra.mxu0 %v1372
        %1959 = vmatpush.bf16.msra.mxu0 %v1371
        %1960 = vmatmul.bf16.gmra.mxu0 %v1936
        %v1961 = vpop.f32.mrf.mxu0
        %v1962 = vadd.f32 %v1949, %v1961
        %v1963 = vpop.f32.mrf.mxu0
        %1964 = vdwg.mxu0
        %1965 = vmatpush.bf16.msra.mxu0 %v1386
        %1966 = vmatpush.bf16.msra.mxu0 %v1385
        %1967 = vmatpush.bf16.msra.mxu0 %v1384
        %1968 = vmatpush.bf16.msra.mxu0 %v1383
        %1969 = vmatpush.bf16.msra.mxu0 %v1382
        %1970 = vmatpush.bf16.msra.mxu0 %v1381
        %1971 = vmatpush.bf16.msra.mxu0 %v1380
        %1972 = vmatpush.bf16.msra.mxu0 %v1379
        %1973 = vmatmul.bf16.gmra.mxu0 %v1937
        %v1974 = vpop.f32.mrf.mxu0
        %v1975 = vadd.f32 %v1962, %v1974
        %v1976 = vpop.f32.mrf.mxu0
        %1977 = vdwg.mxu0
        %1978 = vmatpush.bf16.msra.mxu0 %v1394
        %1979 = vmatpush.bf16.msra.mxu0 %v1393
        %1980 = vmatpush.bf16.msra.mxu0 %v1392
        %1981 = vmatpush.bf16.msra.mxu0 %v1391
        %1982 = vmatpush.bf16.msra.mxu0 %v1390
        %1983 = vmatpush.bf16.msra.mxu0 %v1389
        %1984 = vmatpush.bf16.msra.mxu0 %v1388
        %1985 = vmatpush.bf16.msra.mxu0 %v1387
        %1986 = vmatmul.bf16.gmra.mxu0 %v1938
        %v1987 = vpop.f32.mrf.mxu0
        %v1988 = vadd.f32 %v1975, %v1987
        %v1989 = vpop.f32.mrf.mxu0
        %1990 = vdwg.mxu0
        %v1991 = vadd.f32 %v1843, %v1988
        %v1992 = vpack.c.bf16 %v1991, %v1991
        %1993 = vmatpush.bf16.msra.mxu0 %v1636
        %1994 = vmatpush.bf16.msra.mxu0 %v1633
        %1995 = vmatpush.bf16.msra.mxu0 %v1630
        %1996 = vmatpush.bf16.msra.mxu0 %v1627
        %1997 = vmatpush.bf16.msra.mxu0 %v1624
        %1998 = vmatpush.bf16.msra.mxu0 %v1621
        %1999 = vmatpush.bf16.msra.mxu0 %v1618
        %2000 = vmatpush.bf16.msra.mxu0 %v1615
        %2001 = vmatmul.bf16.gmra.mxu0 %v1992
        %v2002 = vpop.f32.mrf.mxu0
        %v2003 = vadd.f32 0.0, %v2002
        %v2004 = vpop.f32.mrf.mxu0
        %2005 = vdwg.mxu0
        %2006 = vmatpush.bf16.msra.mxu0 %v1637
        %2007 = vmatpush.bf16.msra.mxu0 %v1634
        %2008 = vmatpush.bf16.msra.mxu0 %v1631
        %2009 = vmatpush.bf16.msra.mxu0 %v1628
        %2010 = vmatpush.bf16.msra.mxu0 %v1625
        %2011 = vmatpush.bf16.msra.mxu0 %v1622
        %2012 = vmatpush.bf16.msra.mxu0 %v1619
        %2013 = vmatpush.bf16.msra.mxu0 %v1616
        %2014 = vmatmul.bf16.gmra.mxu0 %v1992
        %v2015 = vpop.f32.mrf.mxu0
        %v2016 = vadd.f32 0.0, %v2015
        %v2017 = vpop.f32.mrf.mxu0
        %2018 = vdwg.mxu0
        %v2019 = vpack.c.bf16 %v2003, %v2003
        %v2021 = vshll.u32 %v2019, 16
        %v2023 = vrot.slane %v2021, 5
        %vm2025 = vsmask.f32 7950
        %vm2026 = vmand %vm1705, %vm2025
        %v2027 = vld [vmem:[#allocation2] sm:$0x8]
        %v2028 = vsel %vm2026, %v2023, %v2027
        %2029 = vst [vmem:[#allocation2] sm:$0x8] %v2028
        %v2030 = vpack.c.bf16 %v2016, %v2016
        %v2032 = vshll.u32 %v2030, 16
        %v2034 = vrot.slane %v2032, 5
        %v2036 = vld [vmem:[#allocation3] sm:$0x8]
        %v2037 = vsel %vm2026, %v2034, %v2036
        %2038 = vst [vmem:[#allocation3] sm:$0x8] %v2037
        %v2039 = vld [vmem:[%s528] sm:$0xff]
        %v2040 = vpack.c.bf16 %v2039, %v2039
        %2041 = vmatpush.bf16.msra.mxu0 %v791
        %2042 = vmatpush.bf16.msra.mxu0 %v788
        %2043 = vmatpush.bf16.msra.mxu0 %v785
        %2044 = vmatpush.bf16.msra.mxu0 %v782
        %2045 = vmatpush.bf16.msra.mxu0 %v779
        %2046 = vmatpush.bf16.msra.mxu0 %v776
        %2047 = vmatpush.bf16.msra.mxu0 %v773
        %2048 = vmatpush.bf16.msra.mxu0 %v770
        %2049 = vmatmul.bf16.gmra.mxu0 %v2040
        %v2050 = vpop.f32.mrf.mxu0
        %v2051 = vadd.f32 0.0, %v2050
        %v2052 = vpop.f32.mrf.mxu0
        %2053 = vdwg.mxu0
        %2054 = vmatpush.bf16.msra.mxu0 %v792
        %2055 = vmatpush.bf16.msra.mxu0 %v789
        %2056 = vmatpush.bf16.msra.mxu0 %v786
        %2057 = vmatpush.bf16.msra.mxu0 %v783
        %2058 = vmatpush.bf16.msra.mxu0 %v780
        %2059 = vmatpush.bf16.msra.mxu0 %v777
        %2060 = vmatpush.bf16.msra.mxu0 %v774
        %2061 = vmatpush.bf16.msra.mxu0 %v771
        %2062 = vmatmul.bf16.gmra.mxu0 %v2040
        %v2063 = vpop.f32.mrf.mxu0
        %v2064 = vadd.f32 0.0, %v2063
        %v2065 = vpop.f32.mrf.mxu0
        %2066 = vdwg.mxu0
        %2067 = vmatpush.bf16.msra.mxu0 %v793
        %2068 = vmatpush.bf16.msra.mxu0 %v790
        %2069 = vmatpush.bf16.msra.mxu0 %v787
        %2070 = vmatpush.bf16.msra.mxu0 %v784
        %2071 = vmatpush.bf16.msra.mxu0 %v781
        %2072 = vmatpush.bf16.msra.mxu0 %v778
        %2073 = vmatpush.bf16.msra.mxu0 %v775
        %2074 = vmatpush.bf16.msra.mxu0 %v772
        %2075 = vmatmul.bf16.gmra.mxu0 %v2040
        %v2076 = vpop.f32.mrf.mxu0
        %v2077 = vadd.f32 0.0, %v2076
        %v2078 = vpop.f32.mrf.mxu0
        %2079 = vdwg.mxu0
        %v2080 = vpack.c.bf16 %v2064, %v2064
        %2081 = vst [vmem:[#allocation2 + $0x4] sm:$0xf] %v2080
        %v2082 = vpack.c.bf16 %v2077, %v2077
        %2083 = vst [vmem:[#allocation3 + $0x4] sm:$0xf] %v2082
        %v2084 = vld [vmem:[#allocation2] sm:$0xf]
        %v2085 = vld [vmem:[#allocation2 + $0x4] sm:$0xf]
        %v2086 = vld [vmem:[#allocation3] sm:$0xf]
        %v2087 = vld [vmem:[#allocation3 + $0x4] sm:$0xf]
        %v2088 = vpack.c.bf16 %v2051, %v2051
        %v2091 = vunpack.c.l.b16 %v2084
        %v2092 = vunpack.c.l.b16 %v2085
        %v2093 = vpack.c.b16 %v2092, %v2091
        %2095 = vmatpush.bf16.xpose.msra.mxu0 0
        %2096 = vmatpush.bf16.xpose.msra.mxu0 0
        %2097 = vmatpush.bf16.xpose.msra.mxu0 0
        %2098 = vmatpush.bf16.xpose.msra.mxu0 0
        %2099 = vmatpush.bf16.xpose.msra.mxu0 0
        %2100 = vmatpush.bf16.xpose.msra.mxu0 0
        %2101 = vmatpush.bf16.xpose.msra.mxu0 0
        %2102 = vmatpush.bf16.xpose.msra.mxu0 %v2093
        %2103 = vmatmul.bf16.gmra.mxu0 %v2088
        %v2104 = vpop.f32.mrf.mxu0
        %v2105 = vadd.f32 0.0, %v2104
        %v2106 = vpop.f32.mrf.mxu0
        %2107 = vdwg.mxu0
        %v2108 = vadd.s32 %v878, 8
        %vm2109 = vcmp.le.s32.totalorder %v880, %v2108
        %vm2110 = vcmp.lt.s32.totalorder %v880, 16
        %vm2111 = vmand %vm2109, %vm2110
        %v2112 = vsel %vm2111, %v2105, -1e+30
        %vm2113 = vcmask 130048
        %v2114 = vsel %vm2113, %v2112, -inf
        %2115 = vmax.xlane.f32.xlu0 %v2114
        %v2116 = vpop.xlane.xlu0 %2115
        %v2117 = vsub.f32 %v2112, %v2116
        %v2118 = vmul.f32 %v2117, 1.442695
        %v2119 = vpow.pop %v2118
        %v2120 = vsel %vm2113, %v2119, 0.0
        %2121 = vadd.xlane.f32.xlu0 %v2120
        %v2122 = vpop.xlane.xlu0 %2121
        %v2123 = vrcp.pop %v2122
        %v2124 = vmul.f32 %v2119, %v2123
        %v2125 = vpack.c.bf16 %v2124, %v2124
        %v2128 = vunpack.c.l.b16 %v2086
        %v2129 = vunpack.c.l.b16 %v2087
        %v2130 = vpack.c.b16 %v2129, %v2128
        %v2133 = vsel %vm2113, %v2125, 0
        %2135 = vmatpush.bf16.msra.mxu0 0
        %2136 = vmatpush.bf16.msra.mxu0 0
        %2137 = vmatpush.bf16.msra.mxu0 0
        %2138 = vmatpush.bf16.msra.mxu0 0
        %2139 = vmatpush.bf16.msra.mxu0 0
        %2140 = vmatpush.bf16.msra.mxu0 0
        %2141 = vmatpush.bf16.msra.mxu0 0
        %2142 = vmatpush.bf16.msra.mxu0 %v2130
        %2143 = vmatmul.bf16.gmra.mxu0 %v2133
        %v2144 = vpop.f32.mrf.mxu0
        %v2145 = vadd.f32 0.0, %v2144
        %v2146 = vpop.f32.mrf.mxu0
        %2147 = vdwg.mxu0
        %v2148 = vpack.c.bf16 %v2145, %v2145
        %2149 = vmatpush.bf16.msra.mxu0 %v959
        %2150 = vmatpush.bf16.msra.mxu0 %v958
        %2151 = vmatpush.bf16.msra.mxu0 %v957
        %2152 = vmatpush.bf16.msra.mxu0 %v956
        %2153 = vmatpush.bf16.msra.mxu0 %v955
        %2154 = vmatpush.bf16.msra.mxu0 %v954
        %2155 = vmatpush.bf16.msra.mxu0 %v953
        %2156 = vmatpush.bf16.msra.mxu0 %v952
        %2157 = vmatmul.bf16.gmra.mxu0 %v2148
        %v2158 = vpop.f32.mrf.mxu0
        %v2159 = vadd.f32 0.0, %v2158
        %v2160 = vpop.f32.mrf.mxu0
        %2161 = vdwg.mxu0
        %v2162 = vadd.f32 %v2039, %v2159
        %v2163 = vpack.c.bf16 %v2162, %v2162
        %2164 = vmatpush.bf16.msra.mxu0 %v1107
        %2165 = vmatpush.bf16.msra.mxu0 %v1103
        %2166 = vmatpush.bf16.msra.mxu0 %v1099
        %2167 = vmatpush.bf16.msra.mxu0 %v1095
        %2168 = vmatpush.bf16.msra.mxu0 %v1091
        %2169 = vmatpush.bf16.msra.mxu0 %v1087
        %2170 = vmatpush.bf16.msra.mxu0 %v1083
        %2171 = vmatpush.bf16.msra.mxu0 %v1079
        %2172 = vmatmul.bf16.gmra.mxu0 %v2163
        %v2173 = vpop.f32.mrf.mxu0
        %v2174 = vadd.f32 0.0, %v2173
        %v2175 = vpop.f32.mrf.mxu0
        %2176 = vdwg.mxu0
        %2177 = vmatpush.bf16.msra.mxu0 %v1108
        %2178 = vmatpush.bf16.msra.mxu0 %v1104
        %2179 = vmatpush.bf16.msra.mxu0 %v1100
        %2180 = vmatpush.bf16.msra.mxu0 %v1096
        %2181 = vmatpush.bf16.msra.mxu0 %v1092
        %2182 = vmatpush.bf16.msra.mxu0 %v1088
        %2183 = vmatpush.bf16.msra.mxu0 %v1084
        %2184 = vmatpush.bf16.msra.mxu0 %v1080
        %2185 = vmatmul.bf16.gmra.mxu0 %v2163
        %v2186 = vpop.f32.mrf.mxu0
        %v2187 = vadd.f32 0.0, %v2186
        %v2188 = vpop.f32.mrf.mxu0
        %2189 = vdwg.mxu0
        %2190 = vmatpush.bf16.msra.mxu0 %v1109
        %2191 = vmatpush.bf16.msra.mxu0 %v1105
        %2192 = vmatpush.bf16.msra.mxu0 %v1101
        %2193 = vmatpush.bf16.msra.mxu0 %v1097
        %2194 = vmatpush.bf16.msra.mxu0 %v1093
        %2195 = vmatpush.bf16.msra.mxu0 %v1089
        %2196 = vmatpush.bf16.msra.mxu0 %v1085
        %2197 = vmatpush.bf16.msra.mxu0 %v1081
        %2198 = vmatmul.bf16.gmra.mxu0 %v2163
        %v2199 = vpop.f32.mrf.mxu0
        %v2200 = vadd.f32 0.0, %v2199
        %v2201 = vpop.f32.mrf.mxu0
        %2202 = vdwg.mxu0
        %2203 = vmatpush.bf16.msra.mxu0 %v1110
        %2204 = vmatpush.bf16.msra.mxu0 %v1106
        %2205 = vmatpush.bf16.msra.mxu0 %v1102
        %2206 = vmatpush.bf16.msra.mxu0 %v1098
        %2207 = vmatpush.bf16.msra.mxu0 %v1094
        %2208 = vmatpush.bf16.msra.mxu0 %v1090
        %2209 = vmatpush.bf16.msra.mxu0 %v1086
        %2210 = vmatpush.bf16.msra.mxu0 %v1082
        %2211 = vmatmul.bf16.gmra.mxu0 %v2163
        %v2212 = vpop.f32.mrf.mxu0
        %v2213 = vadd.f32 0.0, %v2212
        %v2214 = vpop.f32.mrf.mxu0
        %2215 = vdwg.mxu0
        %v2216 = vmul.f32 %v2174, 0.5
        %v2217 = vmul.f32 %v2187, 0.5
        %v2218 = vmul.f32 %v2200, 0.5
        %v2219 = vmul.f32 %v2213, 0.5
        %v2220 = vmul.f32 %v2174, 0.044715
        %v2221 = vmul.f32 %v2187, 0.044715
        %v2222 = vmul.f32 %v2200, 0.044715
        %v2223 = vmul.f32 %v2213, 0.044715
        %v2224 = vmul.f32 %v2220, %v2174
        %v2225 = vmul.f32 %v2221, %v2187
        %v2226 = vmul.f32 %v2222, %v2200
        %v2227 = vmul.f32 %v2223, %v2213
        %v2228 = vmul.f32 %v2224, %v2174
        %v2229 = vmul.f32 %v2225, %v2187
        %v2230 = vmul.f32 %v2226, %v2200
        %v2231 = vmul.f32 %v2227, %v2213
        %v2232 = vadd.f32 %v2174, %v2228
        %v2233 = vadd.f32 %v2187, %v2229
        %v2234 = vadd.f32 %v2200, %v2230
        %v2235 = vadd.f32 %v2213, %v2231
        %v2236 = vmul.f32 %v2232, 0.7978846
        %v2237 = vmul.f32 %v2233, 0.7978846
        %v2238 = vmul.f32 %v2234, 0.7978846
        %v2239 = vmul.f32 %v2235, 0.7978846
        %v2240 = vtanh.pop %v2236
        %v2241 = vtanh.pop %v2237
        %v2242 = vtanh.pop %v2238
        %v2243 = vtanh.pop %v2239
        %v2244 = vadd.f32 %v2240, 1.0
        %v2245 = vadd.f32 %v2241, 1.0
        %v2246 = vadd.f32 %v2242, 1.0
        %v2247 = vadd.f32 %v2243, 1.0
        %v2248 = vmul.f32 %v2216, %v2244
        %v2249 = vmul.f32 %v2217, %v2245
        %v2250 = vmul.f32 %v2218, %v2246
        %v2251 = vmul.f32 %v2219, %v2247
        %v2252 = vpack.c.bf16 %v2248, %v2248
        %v2253 = vpack.c.bf16 %v2249, %v2249
        %v2254 = vpack.c.bf16 %v2250, %v2250
        %v2255 = vpack.c.bf16 %v2251, %v2251
        %2256 = vmatpush.bf16.msra.mxu0 %v1370
        %2257 = vmatpush.bf16.msra.mxu0 %v1369
        %2258 = vmatpush.bf16.msra.mxu0 %v1368
        %2259 = vmatpush.bf16.msra.mxu0 %v1367
        %2260 = vmatpush.bf16.msra.mxu0 %v1366
        %2261 = vmatpush.bf16.msra.mxu0 %v1365
        %2262 = vmatpush.bf16.msra.mxu0 %v1364
        %2263 = vmatpush.bf16.msra.mxu0 %v1363
        %2264 = vmatmul.bf16.gmra.mxu0 %v2252
        %v2265 = vpop.f32.mrf.mxu0
        %v2266 = vadd.f32 0.0, %v2265
        %v2267 = vpop.f32.mrf.mxu0
        %2268 = vdwg.mxu0
        %2269 = vmatpush.bf16.msra.mxu0 %v1378
        %2270 = vmatpush.bf16.msra.mxu0 %v1377
        %2271 = vmatpush.bf16.msra.mxu0 %v1376
        %2272 = vmatpush.bf16.msra.mxu0 %v1375
        %2273 = vmatpush.bf16.msra.mxu0 %v1374
        %2274 = vmatpush.bf16.msra.mxu0 %v1373
        %2275 = vmatpush.bf16.msra.mxu0 %v1372
        %2276 = vmatpush.bf16.msra.mxu0 %v1371
        %2277 = vmatmul.bf16.gmra.mxu0 %v2253
        %v2278 = vpop.f32.mrf.mxu0
        %v2279 = vadd.f32 %v2266, %v2278
        %v2280 = vpop.f32.mrf.mxu0
        %2281 = vdwg.mxu0
        %2282 = vmatpush.bf16.msra.mxu0 %v1386
        %2283 = vmatpush.bf16.msra.mxu0 %v1385
        %2284 = vmatpush.bf16.msra.mxu0 %v1384
        %2285 = vmatpush.bf16.msra.mxu0 %v1383
        %2286 = vmatpush.bf16.msra.mxu0 %v1382
        %2287 = vmatpush.bf16.msra.mxu0 %v1381
        %2288 = vmatpush.bf16.msra.mxu0 %v1380
        %2289 = vmatpush.bf16.msra.mxu0 %v1379
        %2290 = vmatmul.bf16.gmra.mxu0 %v2254
        %v2291 = vpop.f32.mrf.mxu0
        %v2292 = vadd.f32 %v2279, %v2291
        %v2293 = vpop.f32.mrf.mxu0
        %2294 = vdwg.mxu0
        %2295 = vmatpush.bf16.msra.mxu0 %v1394
        %2296 = vmatpush.bf16.msra.mxu0 %v1393
        %2297 = vmatpush.bf16.msra.mxu0 %v1392
        %2298 = vmatpush.bf16.msra.mxu0 %v1391
        %2299 = vmatpush.bf16.msra.mxu0 %v1390
        %2300 = vmatpush.bf16.msra.mxu0 %v1389
        %2301 = vmatpush.bf16.msra.mxu0 %v1388
        %2302 = vmatpush.bf16.msra.mxu0 %v1387
        %2303 = vmatmul.bf16.gmra.mxu0 %v2255
        %v2304 = vpop.f32.mrf.mxu0
        %v2305 = vadd.f32 %v2292, %v2304
        %v2306 = vpop.f32.mrf.mxu0
        %2307 = vdwg.mxu0
        %v2308 = vadd.f32 %v2162, %v2305
        %v2309 = vpack.c.bf16 %v2308, %v2308
        %v2310 = vld [vmem:[%s532] sm:$0xff]
        %v2311 = vld [vmem:[#allocation14] sm:$0xff]
        %v2312 = vld [vmem:[#allocation14 + $0x8] sm:$0xff]
        %v2313 = vld [vmem:[#allocation14 + $0x10] sm:$0xff]
        %v2314 = vld [vmem:[#allocation14 + $0x18] sm:$0xff]
        %v2315 = vld [vmem:[#allocation14 + $0x20] sm:$0xff]
        %v2316 = vld [vmem:[#allocation14 + $0x28] sm:$0xff]
        %v2317 = vld [vmem:[#allocation14 + $0x30] sm:$0xff]
        %v2318 = vld [vmem:[#allocation14 + $0x38] sm:$0xff]
        %v2319 = vld [vmem:[#allocation14 + $0x40] sm:$0xff]
        %v2320 = vld [vmem:[#allocation14 + $0x48] sm:$0xff]
        %v2321 = vld [vmem:[#allocation14 + $0x50] sm:$0xff]
        %v2322 = vld [vmem:[#allocation14 + $0x58] sm:$0xff]
        %v2323 = vld [vmem:[#allocation14 + $0x60] sm:$0xff]
        %v2324 = vld [vmem:[#allocation14 + $0x68] sm:$0xff]
        %v2325 = vld [vmem:[#allocation14 + $0x70] sm:$0xff]
        %v2326 = vld [vmem:[#allocation14 + $0x78] sm:$0xff]
        %v2343 = vunpack.c.l.b16 %v2311
        %v2344 = vunpack.c.h.b16 %v2311
        %v2345 = vunpack.c.l.b16 %v2312
        %v2346 = vunpack.c.h.b16 %v2312
        %v2347 = vunpack.c.l.b16 %v2313
        %v2348 = vunpack.c.h.b16 %v2313
        %v2349 = vunpack.c.l.b16 %v2314
        %v2350 = vunpack.c.h.b16 %v2314
        %v2351 = vunpack.c.l.b16 %v2315
        %v2352 = vunpack.c.h.b16 %v2315
        %v2353 = vunpack.c.l.b16 %v2316
        %v2354 = vunpack.c.h.b16 %v2316
        %v2355 = vunpack.c.l.b16 %v2317
        %v2356 = vunpack.c.h.b16 %v2317
        %v2357 = vunpack.c.l.b16 %v2318
        %v2358 = vunpack.c.h.b16 %v2318
        %v2359 = vunpack.c.l.b16 %v2319
        %v2360 = vunpack.c.h.b16 %v2319
        %v2361 = vunpack.c.l.b16 %v2320
        %v2362 = vunpack.c.h.b16 %v2320
        %v2363 = vunpack.c.l.b16 %v2321
        %v2364 = vunpack.c.h.b16 %v2321
        %v2365 = vunpack.c.l.b16 %v2322
        %v2366 = vunpack.c.h.b16 %v2322
        %v2367 = vunpack.c.l.b16 %v2323
        %v2368 = vunpack.c.h.b16 %v2323
        %v2369 = vunpack.c.l.b16 %v2324
        %v2370 = vunpack.c.h.b16 %v2324
        %v2371 = vunpack.c.l.b16 %v2325
        %v2372 = vunpack.c.h.b16 %v2325
        %v2373 = vunpack.c.l.b16 %v2326
        %v2374 = vunpack.c.h.b16 %v2326
        %v2375 = vpack.c.b16 %v2345, %v2343
        %v2376 = vpack.c.b16 %v2346, %v2344
        %v2377 = vpack.c.b16 %v2349, %v2347
        %v2378 = vpack.c.b16 %v2350, %v2348
        %v2379 = vpack.c.b16 %v2353, %v2351
        %v2380 = vpack.c.b16 %v2354, %v2352
        %v2381 = vpack.c.b16 %v2357, %v2355
        %v2382 = vpack.c.b16 %v2358, %v2356
        %v2383 = vpack.c.b16 %v2361, %v2359
        %v2384 = vpack.c.b16 %v2362, %v2360
        %v2385 = vpack.c.b16 %v2365, %v2363
        %v2386 = vpack.c.b16 %v2366, %v2364
        %v2387 = vpack.c.b16 %v2369, %v2367
        %v2388 = vpack.c.b16 %v2370, %v2368
        %v2389 = vpack.c.b16 %v2373, %v2371
        %v2390 = vpack.c.b16 %v2374, %v2372
        %2407 = vmatpush.bf16.msra.mxu0 %v2389
        %2408 = vmatpush.bf16.msra.mxu0 %v2387
        %2409 = vmatpush.bf16.msra.mxu0 %v2385
        %2410 = vmatpush.bf16.msra.mxu0 %v2383
        %2411 = vmatpush.bf16.msra.mxu0 %v2381
        %2412 = vmatpush.bf16.msra.mxu0 %v2379
        %2413 = vmatpush.bf16.msra.mxu0 %v2377
        %2414 = vmatpush.bf16.msra.mxu0 %v2375
        %2415 = vmatmul.bf16.gmra.mxu0 %v2309
        %v2416 = vpop.f32.mrf.mxu0
        %v2417 = vadd.f32 0.0, %v2416
        %v2418 = vpop.f32.mrf.mxu0
        %2419 = vdwg.mxu0
        %2420 = vmatpush.bf16.msra.mxu0 %v2390
        %2421 = vmatpush.bf16.msra.mxu0 %v2388
        %2422 = vmatpush.bf16.msra.mxu0 %v2386
        %2423 = vmatpush.bf16.msra.mxu0 %v2384
        %2424 = vmatpush.bf16.msra.mxu0 %v2382
        %2425 = vmatpush.bf16.msra.mxu0 %v2380
        %2426 = vmatpush.bf16.msra.mxu0 %v2378
        %2427 = vmatpush.bf16.msra.mxu0 %v2376
        %2428 = vmatmul.bf16.gmra.mxu0 %v2309
        %v2429 = vpop.f32.mrf.mxu0
        %v2430 = vadd.f32 0.0, %v2429
        %v2431 = vpop.f32.mrf.mxu0
        %2432 = vdwg.mxu0
        %v2433 = vmax.f32 %v2417, %v2430
        %2434 = vmax.xlane.f32.xlu0 %v2433
        %v2435 = vpop.xlane.xlu0 %2434
        %v2436 = vmax.f32 %v2435, -1e+30
        %v2437 = vsub.f32 -1e+30, %v2436
        %v2438 = vmul.f32 %v2437, 1.442695
        %v2439 = vpow.pop %v2438
        %v2440 = vmul.f32 %v2439, 0.0
        %v2441 = vsub.f32 %v2417, %v2436
        %v2442 = vsub.f32 %v2430, %v2436
        %v2443 = vmul.f32 %v2441, 1.442695
        %v2444 = vpow.pop %v2443
        %v2445 = vmul.f32 %v2442, 1.442695
        %v2446 = vpow.pop %v2445
        %v2447 = vadd.f32 %v2444, %v2446
        %2448 = vadd.xlane.f32.xlu0 %v2447
        %v2449 = vpop.xlane.xlu0 %2448
        %v2450 = vadd.f32 %v2440, %v2449
        %v2451 = vadd.s32 %v880, 128
        %2452 = vset.pattern.permute.xlu0 0
        %2453 = vperm.xlu0 %2452, %v2310
        %v2454 = vpop.permute.xlu0 %2453
        %vm2455 = vcmp.eq.s32.totalorder %v880, %v2454
        %vm2456 = vcmp.eq.s32.totalorder %v2451, %v2454
        %v2457 = vsel %vm2455, %v2417, 0.0
        %v2458 = vsel %vm2456, %v2430, 0.0
        %v2459 = vadd.f32 %v2457, %v2458
        %2460 = vadd.xlane.f32.xlu0 %v2459
        %v2461 = vpop.xlane.xlu0 %2460
        %v2462 = vadd.f32 %v2461, 0.0
        %v2463 = vlog2.pop %v2450
        %v2464 = vmul.f32 %v2463, 0.6931472
        %v2465 = vadd.f32 %v2436, %v2464
        %vm2466 = vcmp.ne.s32.totalorder %v2310, 4294967196
        %v2467 = vsel %vm2466, 1, 0
        %v2468 = vcvt.s32.f32 %v2467
        %v2469 = vsub.f32 %v2465, %v2462
        %v2470 = vmul.f32 %v2469, %v2468
        %vm2471 = vcmask 7168
        %v2472 = vsel %vm2471, %v2470, 0.0
        %2473 = vadd.xlane.f32.xlu0 %v2472
        %v2474 = vpop.xlane.xlu0 %2473
        %v2475 = vrot.slane %v2474, 4
        %v2476 = vadd.f32 %v2474, %v2475
        %v2477 = vrot.slane %v2476, 2
        %v2478 = vadd.f32 %v2476, %v2477
        %v2479 = vrot.slane %v2478, 1
        %v2480 = vadd.f32 %v2478, %v2479
        %s2481 = vtos %v2480
        %v2482 = vstv %s2481
        %vm2483 = vcmask 0
        %2484 = vst.msk [vmem:[%s535] sm:$0x1] %vm2483, %v2482
        %v2485 = vsel %vm2471, %v2468, 0.0
        %2486 = vadd.xlane.f32.xlu0 %v2485
        %v2487 = vpop.xlane.xlu0 %2486
        %v2488 = vrot.slane %v2487, 4
        %v2489 = vadd.f32 %v2487, %v2488
        %v2490 = vrot.slane %v2489, 2
        %v2491 = vadd.f32 %v2489, %v2490
        %v2492 = vrot.slane %v2491, 1
        %v2493 = vadd.f32 %v2491, %v2492
        %s2494 = vtos %v2493
        %v2495 = vstv %s2494
        %2496 = vst.msk [vmem:[%s538] sm:$0x1] %vm2483, %v2495
        %p2497 = scmp.lt.s32.totalorder %s27, 1
        %s2498 = scalar_select %p2497, %s27, 1
        %s2499 = scalar_lea.vmem %s10, %s2498
        %p2500 = scmp.lt.s32.totalorder %s27, 1
        %s2501 = scalar_select %p2500, %s27, 1
        %s2502 = scalar_lea.vmem %s11, %s2501
        // Predicated region
        $region89: #{tpu_custom_call.1} parent=59 // pred_check
          %p2503 = pneg %p270
        $region90: #{tpu_custom_call.1} parent=59 // pred_check_branch
          %2505 = sbr.rel (%p2503) target = $region92
        $region91: #{tpu_custom_call.1} parent=59 // pred_region
          _
        $region92: #{tpu_custom_call.1} parent=59 // pred_fallthru
          _
        // Predicated region
        $region93: #{tpu_custom_call.1} parent=59 // pred_check
          %p2506 = pneg %p296
        $region94: #{tpu_custom_call.1} parent=59 // pred_check_branch
          %2508 = sbr.rel (%p2506) target = $region96
        $region95: #{tpu_custom_call.1} parent=59 // pred_region
          _
        $region96: #{tpu_custom_call.1} parent=59 // pred_fallthru
          _
      $region60: #{tpu_custom_call.1} parent=5 // pred_fallthru
        _
      %p2509 = scmp.le.s32.totalorder 2, %s22
      // Predicated region
      $region97: #{tpu_custom_call.1} parent=5 // pred_check
        %p2510 = pneg %p2509
      $region98: #{tpu_custom_call.1} parent=5 // pred_check_branch
        %2512 = sbr.rel (%p2510) target = $region100
      $region99: #{tpu_custom_call.1} parent=5 // pred_region
        %s2513 = ssub.s32 %s22, 2
        // Predicated region
        $region101: #{tpu_custom_call.1} parent=99 // pred_check
          %p2514 = pneg %p276
        $region102: #{tpu_custom_call.1} parent=99 // pred_check_branch
          %2516 = sbr.rel (%p2514) target = $region104
        $region103: #{tpu_custom_call.1} parent=99 // pred_region
          %p2517 = scmp.lt.s32.totalorder %s28, 1
          %s2518 = scalar_select %p2517, %s28, 1
          %s2519 = scalar_lea.vmem %s10, %s2518
        $region104: #{tpu_custom_call.1} parent=99 // pred_fallthru
          _
        // Predicated region
        $region105: #{tpu_custom_call.1} parent=99 // pred_check
          %p2520 = pneg %p302
        $region106: #{tpu_custom_call.1} parent=99 // pred_check_branch
          %2522 = sbr.rel (%p2520) target = $region108
        $region107: #{tpu_custom_call.1} parent=99 // pred_region
          %p2523 = scmp.lt.s32.totalorder %s28, 1
          %s2524 = scalar_select %p2523, %s28, 1
          %s2525 = scalar_lea.vmem %s11, %s2524
        $region108: #{tpu_custom_call.1} parent=99 // pred_fallthru
          _
      $region100: #{tpu_custom_call.1} parent=5 // pred_fallthru
        _
    $region6: #{tpu_custom_call.1} parent=1 // loop_footer
      %s26 = sadd.s32 1, %s22
    $region7: #{tpu_custom_call.1} parent=1 // loop_footer_branch
      %21 = sbr.rel target = $region3
    $region8: #{tpu_custom_call.1} parent=1 // loop_exit
      _
    %2526 = vsyncpa [#allocation5], 1
    %s2527 = scalar_lea.sflag [#allocation5], 1
    %2528 = vsyncpa %s2527, 1
    %2529 = vsyncpa [#allocation7], 1
    %2530 = vsyncpa [#allocation10], 1
    %2531 = vsyncpa [#allocation13], 1

</llo_original>
